<compile_context>
chip_gen: v6e
topology: v6e:2x2x1
jax: 0.10.0
libtpu: 0.0.40
codegen_flags: <defaults>
</compile_context>

<pallas_src>
import jax
import jax.numpy as jnp
import numpy as np
from jax.experimental import pallas as pl
from jax.experimental.pallas import tpu as pltpu

LN_EPS = 1e-5

# Row indices inside the packed (NROWS, FMAX) "vecs" parameter slab.
ROW_G0, ROW_BE0 = 0, 1               # ln0 gamma / beta          (state_size)
ROW_B1, ROW_G1, ROW_BE1 = 2, 3, 4    # fc1 bias, ln1 gamma/beta  (hidden1)
ROW_B2, ROW_G2, ROW_BE2 = 5, 6, 7    # fc2 bias, ln2 gamma/beta  (hidden2)
ROW_W3, ROW_B3 = 8, 9                # fc3 weight row (hidden2), fc3 bias at [ROW_B3, 0]
NROWS = 16                           # rows padded to a sublane multiple


def _round_up(x, m):
    return ((x + m - 1) // m) * m


def _layernorm(x, gamma, beta):
    mu = jnp.mean(x, axis=-1, keepdims=True)
    xc = x - mu
    var = jnp.mean(xc * xc, axis=-1, keepdims=True)
    return xc * jax.lax.rsqrt(var + LN_EPS) * gamma + beta


def critic_kernel(state_ref, action_ref, w1_ref, w2s_ref, w2a_ref, vecs_ref, out_ref):
    S = state_ref.shape[1]
    H1 = w1_ref.shape[1]
    H2 = w2s_ref.shape[1]
    # Output block is (n_chunks, chunk): batch rows of this tile, lane-major.
    n_chunks, chunk = out_ref.shape

    def vrow(r, n):
        # Static (1, n) slice of the packed parameter slab; broadcasts over the chunk.
        return vecs_ref[r:r + 1, :n]

    b3 = vecs_ref[ROW_B3:ROW_B3 + 1, 0:1]        # (1, 1)

    # Small resident weights (a few vregs total).
    w1 = w1_ref[...]
    w2s = w2s_ref[...]
    w2a = w2a_ref[...]

    # Statically-unrolled chunk loop (n_chunks is small); every slice offset is a
    # compile-time constant, so no dynamic-slice lowering is needed.
    for c in range(n_chunks):
        r0 = c * chunk
        st = state_ref[r0:r0 + chunk, :].astype(jnp.float32)     # bf16 stream -> f32 stats
        ac = action_ref[r0:r0 + chunk, :].astype(jnp.bfloat16)

        # ln0(state) -- statistics in f32.
        s = _layernorm(st, vrow(ROW_G0, S), vrow(ROW_BE0, S))

        # fc1 -> ln1 -> relu   (bf16 MXU inputs, f32 accumulation)
        x = jnp.dot(s.astype(jnp.bfloat16), w1,
                    preferred_element_type=jnp.float32) + vrow(ROW_B1, H1)
        xs = jnp.maximum(_layernorm(x, vrow(ROW_G1, H1), vrow(ROW_BE1, H1)), 0.0)

        # fc2(concat(xs, action)) == xs @ W2_state + action @ W2_action + b2  (exact)
        x = (jnp.dot(xs.astype(jnp.bfloat16), w2s, preferred_element_type=jnp.float32)
             + jnp.dot(ac, w2a, preferred_element_type=jnp.float32)
             + vrow(ROW_B2, H2))
        x = jnp.maximum(_layernorm(x, vrow(ROW_G2, H2), vrow(ROW_BE2, H2)), 0.0)

        # fc3 (out_features = 1): contract over H2 with the batch chunk on the MXU's
        # N axis (q.k^T-style dimension numbers) so the result is lane-dense (.., chunk).
        # We feed 8 slab rows (row 0 = fc3.weight, rest ignored) to keep a full sublane
        # tile on the lhs; f32 operands with HIGHEST precision keep fc3 at ~f32 accuracy.
        w3_rows = vecs_ref[ROW_W3:ROW_W3 + 8, :H2]                 # (8, H2)
        res = jax.lax.dot_general(
            w3_rows, x,
            dimension_numbers=(((1,), (1,)), ((), ())),
            precision=jax.lax.Precision.HIGHEST,
            preferred_element_type=jnp.float32)                    # (8, chunk)
        out_ref[c:c + 1, :] = res[0:1, :] + b3                     # dense lane-major store


def _critic_pallas(state, action, params, tb, chunk_rows):
    """One pallas_call over a batch that is an exact multiple of the tile `tb`."""
    b, s_dim = state.shape
    a_dim = action.shape[1]
    w1, w2s, w2a, vecs = params["w1"], params["w2s"], params["w2a"], params["vecs"]
    h1, h2 = w1.shape[1], w2s.shape[1]
    nrows, fmax = vecs.shape
    assert b % tb == 0 and tb % 16 == 0, (b, tb)

    # Compute-chunking inside a tile; chunk offsets stay aligned to the bf16 sublane
    # packing (16 rows).  Falls back to a single chunk when the tile is small/ragged.
    if tb > chunk_rows and chunk_rows % 16 == 0 and tb % chunk_rows == 0:
        chunk = chunk_rows
    else:
        chunk = tb
    n_chunks = tb // chunk
    n_tiles = b // tb

    out = pl.pallas_call(
        critic_kernel,
        out_shape=jax.ShapeDtypeStruct((n_tiles, n_chunks, chunk), jnp.float32),
        grid=(n_tiles,),
        in_specs=[
            pl.BlockSpec((tb, s_dim), lambda i: (i, 0)),      # state   (batch tiled)
            pl.BlockSpec((tb, a_dim), lambda i: (i, 0)),      # action  (batch tiled)
            pl.BlockSpec((s_dim, h1), lambda i: (0, 0)),      # w1        (VMEM-resident)
            pl.BlockSpec((h1, h2), lambda i: (0, 0)),         # w2_state  (VMEM-resident)
            pl.BlockSpec((a_dim, h2), lambda i: (0, 0)),      # w2_action (VMEM-resident)
            pl.BlockSpec((nrows, fmax), lambda i: (0, 0)),    # packed LN/bias/fc3 slab
        ],
        # Lane-dense output: batch runs along the last (lane) axis of each block.
        out_specs=pl.BlockSpec((None, n_chunks, chunk), lambda i: (i, 0, 0)),
        compiler_params=pltpu.CompilerParams(
            dimension_semantics=("parallel",),                # batch axis -> megacore on v7x
            vmem_limit_bytes=32 * 1024 * 1024,
        ),
    )(state, action, w1, w2s, w2a, vecs)
    # (n_tiles, n_chunks, chunk) row-major == batch order -> (b, 1).
    return out.reshape(b, 1)


def critic_forward(state, action, params, *, block_batch=2048, chunk_rows=256):
    """Full Critic forward pass.

    The batch is split into an exactly-tiled main pallas_call plus (if needed) a small
    padded tail call, so the full input arrays are never copied just for padding.
    """
    B = state.shape[0]
    TB = min(block_batch, _round_up(B, 16))
    # v7x megacore: keep >= 2 grid steps when a large batch would fit a single tile.
    if B >= 512 and B <= TB and B % 32 == 0:
        TB = B // 2

    n_full = B // TB
    outs = []
    if n_full > 0:
        nb = n_full * TB
        outs.append(_critic_pallas(state[:nb], action[:nb], params, TB, chunk_rows))
    rem = B - n_full * TB
    if rem > 0:
        tbr = _round_up(rem, 16)
        st = state[B - rem:]
        ac = action[B - rem:]
        if tbr != rem:  # pad only the small tail slice, never the full batch
            st = jnp.pad(st, ((0, tbr - rem), (0, 0)))
            ac = jnp.pad(ac, ((0, tbr - rem), (0, 0)))
        outs.append(_critic_pallas(st, ac, params, tbr, chunk_rows)[:rem])
    return outs[0] if len(outs) == 1 else jnp.concatenate(outs, axis=0)


def init_params(key, state_size, action_size, hidden1, hidden2):
    """Parameter init mirroring Critic.__init__/reset_parameters.

    Note: hidden_init() in the PyTorch reference uses weight.size()[0]
    (== out_features for nn.Linear) as 'fan_in'; that convention is reproduced.
    Linear weights are stored pre-transposed as (in, out) so the kernel does x @ W.
    """
    ks = jax.random.split(key, 6)

    def u(k, shape, lim):
        return jax.random.uniform(k, shape, jnp.float32, -lim, lim)

    w1 = u(ks[0], (state_size, hidden1), 1.0 / np.sqrt(hidden1))
    b1 = u(ks[1], (hidden1,), 1.0 / np.sqrt(state_size))
    w2 = u(ks[2], (hidden1 + action_size, hidden2), 1.0 / np.sqrt(hidden2))
    b2 = u(ks[3], (hidden2,), 1.0 / np.sqrt(hidden1 + action_size))
    w3 = u(ks[4], (hidden2, 1), 0.003)
    b3 = u(ks[5], (1,), 1.0 / np.sqrt(hidden2))

    # Lane-dense packed slab holding all LayerNorm gammas/betas, biases and fc3.
    fmax = _round_up(max(state_size, hidden1, hidden2), 128)
    vecs = jnp.zeros((NROWS, fmax), jnp.float32)
    vecs = vecs.at[ROW_G0, :state_size].set(1.0)   # LayerNorm defaults: weight=1, bias=0
    vecs = vecs.at[ROW_G1, :hidden1].set(1.0)
    vecs = vecs.at[ROW_G2, :hidden2].set(1.0)
    vecs = vecs.at[ROW_B1, :hidden1].set(b1)
    vecs = vecs.at[ROW_B2, :hidden2].set(b2)
    vecs = vecs.at[ROW_W3, :hidden2].set(w3[:, 0])
    vecs = vecs.at[ROW_B3, 0].set(b3[0])

    return {
        # MXU weights in bf16 (kernel accumulates in f32).
        "w1": w1.astype(jnp.bfloat16),
        "w2s": w2[:hidden1, :].astype(jnp.bfloat16),
        "w2a": w2[hidden1:, :].astype(jnp.bfloat16),
        "vecs": vecs,
    }


def critic_reference(state, action, params):
    """Pure-JAX reference mirroring the kernel's precision policy
    (bf16 streamed inputs, bf16 matmul inputs, f32 LN statistics / accumulation)."""
    def ln(x, g, b):
        mu = jnp.mean(x, axis=-1, keepdims=True)
        var = jnp.mean((x - mu) ** 2, axis=-1, keepdims=True)
        return (x - mu) * jax.lax.rsqrt(var + LN_EPS) * g + b

    vecs = params["vecs"]
    S = state.shape[1]
    H1 = params["w1"].shape[1]
    H2 = params["w2s"].shape[1]
    g0, be0 = vecs[ROW_G0, :S], vecs[ROW_BE0, :S]
    b1, g1, be1 = vecs[ROW_B1, :H1], vecs[ROW_G1, :H1], vecs[ROW_BE1, :H1]
    b2, g2, be2 = vecs[ROW_B2, :H2], vecs[ROW_G2, :H2], vecs[ROW_BE2, :H2]
    w3, b3 = vecs[ROW_W3, :H2], vecs[ROW_B3, 0]

    s = ln(state.astype(jnp.float32), g0, be0)
    x = jnp.dot(s.astype(jnp.bfloat16), params["w1"],
                preferred_element_type=jnp.float32) + b1
    xs = jnp.maximum(ln(x, g1, be1), 0.0)
    x = (jnp.dot(xs.astype(jnp.bfloat16), params["w2s"],
                 preferred_element_type=jnp.float32)
         + jnp.dot(action.astype(jnp.bfloat16), params["w2a"],
                   preferred_element_type=jnp.float32)
         + b2)
    x = jnp.maximum(ln(x, g2, be2), 0.0)
    return jnp.sum(x * w3, axis=-1, keepdims=True) + b3


if __name__ == "__main__":
    # Small shapes; batch deliberately not a tile multiple to exercise the main + tail
    # split, a multi-step grid (resident weights) and the in-tile chunk loop.
    batch = 72
    state_size = 32
    action_size = 8
    hidden1 = 64
    hidden2 = 32

    key = jax.random.PRNGKey(0)
    kp, ks, ka = jax.random.split(key, 3)
    params = init_params(kp, state_size, action_size, hidden1, hidden2)
    # bf16 activation streaming (LN statistics are taken in f32 inside the kernel).
    state = jax.random.normal(ks, (batch, state_size), jnp.float32).astype(jnp.bfloat16)
    action = jax.random.normal(ka, (batch, action_size), jnp.float32).astype(jnp.bfloat16)

    out = jax.block_until_ready(
        critic_forward(state, action, params, block_batch=32, chunk_rows=16))
    ref = critic_reference(state, action, params)

    assert out.shape == (batch, 1), out.shape
    assert jnp.allclose(out, ref, atol=5e-4, rtol=5e-3), (out, ref)
    print("KERNEL_OK")
</pallas_src>

<mosaic_0001>
module attributes {stable_mosaic.version = 11 : i64} {
  func.func @critic_kernel(%arg0: i32, %arg1: memref<32x32xbf16, #tpu.memory_space<vmem>>, %arg2: memref<32x8xbf16, #tpu.memory_space<vmem>>, %arg3: memref<32x64xbf16, #tpu.memory_space<vmem>>, %arg4: memref<64x32xbf16, #tpu.memory_space<vmem>>, %arg5: memref<8x32xbf16, #tpu.memory_space<vmem>>, %arg6: memref<16x128xf32, #tpu.memory_space<vmem>>, %arg7: memref<1x2x16xf32, #tpu.memory_space<vmem>>) attributes {dimension_semantics = [#tpu.dimension_semantics<parallel>], iteration_bounds = array<i64: 2>, scalar_prefetch = 0 : i64, scratch_operands = 0 : i64, tpu.core_type = #tpu.core_type<tc>, window_params = [{transform_indices = @transform_0, window_bounds = array<i64: 32, 32>}, {transform_indices = @transform_1, window_bounds = array<i64: 32, 8>}, {pipeline_mode = #tpu.pipeline_mode<synchronous>, transform_indices = @transform_2, window_bounds = array<i64: 32, 64>}, {pipeline_mode = #tpu.pipeline_mode<synchronous>, transform_indices = @transform_3, window_bounds = array<i64: 64, 32>}, {pipeline_mode = #tpu.pipeline_mode<synchronous>, transform_indices = @transform_4, window_bounds = array<i64: 8, 32>}, {pipeline_mode = #tpu.pipeline_mode<synchronous>, transform_indices = @transform_5, window_bounds = array<i64: 16, 128>}, {transform_indices = @transform_6, window_bounds = array<i64: 1, 2, 16>}]} {
    %c9 = arith.constant 9 : index
    %c0 = arith.constant 0 : index
    %0 = vector.load %arg6[%c9, %c0] : memref<16x128xf32, #tpu.memory_space<vmem>>, vector<1x1xf32>
    %c0_0 = arith.constant 0 : index
    %c0_1 = arith.constant 0 : index
    %1 = vector.load %arg3[%c0_0, %c0_1] : memref<32x64xbf16, #tpu.memory_space<vmem>>, vector<32x64xbf16>
    %c0_2 = arith.constant 0 : index
    %c0_3 = arith.constant 0 : index
    %2 = vector.load %arg4[%c0_2, %c0_3] : memref<64x32xbf16, #tpu.memory_space<vmem>>, vector<64x32xbf16>
    %c0_4 = arith.constant 0 : index
    %c0_5 = arith.constant 0 : index
    %3 = vector.load %arg5[%c0_4, %c0_5] : memref<8x32xbf16, #tpu.memory_space<vmem>>, vector<8x32xbf16>
    %c0_6 = arith.constant 0 : index
    %c0_7 = arith.constant 0 : index
    %4 = vector.load %arg1[%c0_6, %c0_7] : memref<32x32xbf16, #tpu.memory_space<vmem>>, vector<16x32xbf16>
    %5 = arith.extf %4 : vector<16x32xbf16> to vector<16x32xf32>
    %c0_8 = arith.constant 0 : index
    %c0_9 = arith.constant 0 : index
    %6 = vector.load %arg2[%c0_8, %c0_9] : memref<32x8xbf16, #tpu.memory_space<vmem>>, vector<16x8xbf16>
    %c0_10 = arith.constant 0 : index
    %c0_11 = arith.constant 0 : index
    %7 = vector.load %arg6[%c0_10, %c0_11] : memref<16x128xf32, #tpu.memory_space<vmem>>, vector<1x32xf32>
    %c1 = arith.constant 1 : index
    %c0_12 = arith.constant 0 : index
    %8 = vector.load %arg6[%c1, %c0_12] : memref<16x128xf32, #tpu.memory_space<vmem>>, vector<1x32xf32>
    %cst = arith.constant dense<0.000000e+00> : vector<16xf32>
    %9 = vector.multi_reduction <add>, %5, %cst [1] : vector<16x32xf32> to vector<16xf32>
    %10 = vector.shape_cast %9 : vector<16xf32> to vector<16x1xf32>
    %cst_13 = arith.constant 3.200000e+01 : f32
    %11 = vector.broadcast %cst_13 : f32 to vector<16x1xf32>
    %12 = arith.divf %10, %11 : vector<16x1xf32>
    %13 = vector.broadcast %12 : vector<16x1xf32> to vector<16x32xf32>
    %14 = arith.subf %5, %13 : vector<16x32xf32>
    %15 = arith.mulf %14, %14 : vector<16x32xf32>
    %cst_14 = arith.constant dense<0.000000e+00> : vector<16xf32>
    %16 = vector.multi_reduction <add>, %15, %cst_14 [1] : vector<16x32xf32> to vector<16xf32>
    %17 = vector.shape_cast %16 : vector<16xf32> to vector<16x1xf32>
    %cst_15 = arith.constant 3.200000e+01 : f32
    %18 = vector.broadcast %cst_15 : f32 to vector<16x1xf32>
    %19 = arith.divf %17, %18 : vector<16x1xf32>
    %cst_16 = arith.constant 9.99999974E-6 : f32
    %20 = vector.broadcast %cst_16 : f32 to vector<16x1xf32>
    %21 = arith.addf %19, %20 : vector<16x1xf32>
    %22 = math.rsqrt %21 : vector<16x1xf32>
    %23 = vector.broadcast %22 : vector<16x1xf32> to vector<16x32xf32>
    %24 = arith.mulf %14, %23 : vector<16x32xf32>
    %25 = vector.broadcast %7 : vector<1x32xf32> to vector<16x32xf32>
    %26 = arith.mulf %24, %25 : vector<16x32xf32>
    %27 = vector.broadcast %8 : vector<1x32xf32> to vector<16x32xf32>
    %28 = arith.addf %26, %27 : vector<16x32xf32>
    %29 = arith.truncf %28 : vector<16x32xf32> to vector<16x32xbf16>
    %cst_17 = arith.constant dense<0.000000e+00> : vector<16x64xf32>
    %30 = tpu.matmul %29, %1, %cst_17 {dimension_numbers = #tpu.dot_dimension_numbers<[1], [0], [0], [1], [0, 0, 1, 1], [], []>} : vector<16x32xbf16>, vector<32x64xbf16>, vector<16x64xf32> -> vector<16x64xf32>
    %c2 = arith.constant 2 : index
    %c0_18 = arith.constant 0 : index
    %31 = vector.load %arg6[%c2, %c0_18] : memref<16x128xf32, #tpu.memory_space<vmem>>, vector<1x64xf32>
    %32 = vector.broadcast %31 : vector<1x64xf32> to vector<16x64xf32>
    %33 = arith.addf %30, %32 : vector<16x64xf32>
    %c3 = arith.constant 3 : index
    %c0_19 = arith.constant 0 : index
    %34 = vector.load %arg6[%c3, %c0_19] : memref<16x128xf32, #tpu.memory_space<vmem>>, vector<1x64xf32>
    %c4 = arith.constant 4 : index
    %c0_20 = arith.constant 0 : index
    %35 = vector.load %arg6[%c4, %c0_20] : memref<16x128xf32, #tpu.memory_space<vmem>>, vector<1x64xf32>
    %cst_21 = arith.constant dense<0.000000e+00> : vector<16xf32>
    %36 = vector.multi_reduction <add>, %33, %cst_21 [1] : vector<16x64xf32> to vector<16xf32>
    %37 = vector.shape_cast %36 : vector<16xf32> to vector<16x1xf32>
    %cst_22 = arith.constant 6.400000e+01 : f32
    %38 = vector.broadcast %cst_22 : f32 to vector<16x1xf32>
    %39 = arith.divf %37, %38 : vector<16x1xf32>
    %40 = vector.broadcast %39 : vector<16x1xf32> to vector<16x64xf32>
    %41 = arith.subf %33, %40 : vector<16x64xf32>
    %42 = arith.mulf %41, %41 : vector<16x64xf32>
    %cst_23 = arith.constant dense<0.000000e+00> : vector<16xf32>
    %43 = vector.multi_reduction <add>, %42, %cst_23 [1] : vector<16x64xf32> to vector<16xf32>
    %44 = vector.shape_cast %43 : vector<16xf32> to vector<16x1xf32>
    %cst_24 = arith.constant 6.400000e+01 : f32
    %45 = vector.broadcast %cst_24 : f32 to vector<16x1xf32>
    %46 = arith.divf %44, %45 : vector<16x1xf32>
    %cst_25 = arith.constant 9.99999974E-6 : f32
    %47 = vector.broadcast %cst_25 : f32 to vector<16x1xf32>
    %48 = arith.addf %46, %47 : vector<16x1xf32>
    %49 = math.rsqrt %48 : vector<16x1xf32>
    %50 = vector.broadcast %49 : vector<16x1xf32> to vector<16x64xf32>
    %51 = arith.mulf %41, %50 : vector<16x64xf32>
    %52 = vector.broadcast %34 : vector<1x64xf32> to vector<16x64xf32>
    %53 = arith.mulf %51, %52 : vector<16x64xf32>
    %54 = vector.broadcast %35 : vector<1x64xf32> to vector<16x64xf32>
    %55 = arith.addf %53, %54 : vector<16x64xf32>
    %cst_26 = arith.constant 0.000000e+00 : f32
    %56 = vector.broadcast %cst_26 : f32 to vector<16x64xf32>
    %57 = arith.maximumf %55, %56 : vector<16x64xf32>
    %58 = arith.truncf %57 : vector<16x64xf32> to vector<16x64xbf16>
    %cst_27 = arith.constant dense<0.000000e+00> : vector<16x32xf32>
    %59 = tpu.matmul %58, %2, %cst_27 {dimension_numbers = #tpu.dot_dimension_numbers<[1], [0], [0], [1], [0, 0, 1, 1], [], []>} : vector<16x64xbf16>, vector<64x32xbf16>, vector<16x32xf32> -> vector<16x32xf32>
    %cst_28 = arith.constant dense<0.000000e+00> : vector<16x32xf32>
    %60 = tpu.matmul %6, %3, %cst_28 {dimension_numbers = #tpu.dot_dimension_numbers<[1], [0], [0], [1], [0, 0, 1, 1], [], []>} : vector<16x8xbf16>, vector<8x32xbf16>, vector<16x32xf32> -> vector<16x32xf32>
    %61 = arith.addf %59, %60 : vector<16x32xf32>
    %c5 = arith.constant 5 : index
    %c0_29 = arith.constant 0 : index
    %62 = vector.load %arg6[%c5, %c0_29] : memref<16x128xf32, #tpu.memory_space<vmem>>, vector<1x32xf32>
    %63 = vector.broadcast %62 : vector<1x32xf32> to vector<16x32xf32>
    %64 = arith.addf %61, %63 : vector<16x32xf32>
    %c6 = arith.constant 6 : index
    %c0_30 = arith.constant 0 : index
    %65 = vector.load %arg6[%c6, %c0_30] : memref<16x128xf32, #tpu.memory_space<vmem>>, vector<1x32xf32>
    %c7 = arith.constant 7 : index
    %c0_31 = arith.constant 0 : index
    %66 = vector.load %arg6[%c7, %c0_31] : memref<16x128xf32, #tpu.memory_space<vmem>>, vector<1x32xf32>
    %cst_32 = arith.constant dense<0.000000e+00> : vector<16xf32>
    %67 = vector.multi_reduction <add>, %64, %cst_32 [1] : vector<16x32xf32> to vector<16xf32>
    %68 = vector.shape_cast %67 : vector<16xf32> to vector<16x1xf32>
    %cst_33 = arith.constant 3.200000e+01 : f32
    %69 = vector.broadcast %cst_33 : f32 to vector<16x1xf32>
    %70 = arith.divf %68, %69 : vector<16x1xf32>
    %71 = vector.broadcast %70 : vector<16x1xf32> to vector<16x32xf32>
    %72 = arith.subf %64, %71 : vector<16x32xf32>
    %73 = arith.mulf %72, %72 : vector<16x32xf32>
    %cst_34 = arith.constant dense<0.000000e+00> : vector<16xf32>
    %74 = vector.multi_reduction <add>, %73, %cst_34 [1] : vector<16x32xf32> to vector<16xf32>
    %75 = vector.shape_cast %74 : vector<16xf32> to vector<16x1xf32>
    %cst_35 = arith.constant 3.200000e+01 : f32
    %76 = vector.broadcast %cst_35 : f32 to vector<16x1xf32>
    %77 = arith.divf %75, %76 : vector<16x1xf32>
    %cst_36 = arith.constant 9.99999974E-6 : f32
    %78 = vector.broadcast %cst_36 : f32 to vector<16x1xf32>
    %79 = arith.addf %77, %78 : vector<16x1xf32>
    %80 = math.rsqrt %79 : vector<16x1xf32>
    %81 = vector.broadcast %80 : vector<16x1xf32> to vector<16x32xf32>
    %82 = arith.mulf %72, %81 : vector<16x32xf32>
    %83 = vector.broadcast %65 : vector<1x32xf32> to vector<16x32xf32>
    %84 = arith.mulf %82, %83 : vector<16x32xf32>
    %85 = vector.broadcast %66 : vector<1x32xf32> to vector<16x32xf32>
    %86 = arith.addf %84, %85 : vector<16x32xf32>
    %cst_37 = arith.constant 0.000000e+00 : f32
    %87 = vector.broadcast %cst_37 : f32 to vector<16x32xf32>
    %88 = arith.maximumf %86, %87 : vector<16x32xf32>
    %c8 = arith.constant 8 : index
    %c0_38 = arith.constant 0 : index
    %89 = vector.load %arg6[%c8, %c0_38] : memref<16x128xf32, #tpu.memory_space<vmem>>, vector<8x32xf32>
    %cst_39 = arith.constant dense<0.000000e+00> : vector<8x16xf32>
    %90 = tpu.matmul %89, %88, %cst_39 {dimension_numbers = #tpu.dot_dimension_numbers<[1], [1], [0], [0], [0, 0, 1, 0], [], []>, precision = #tpu.contract_precision<fp32>} : vector<8x32xf32>, vector<16x32xf32>, vector<8x16xf32> -> vector<8x16xf32>
    %91 = vector.extract_strided_slice %90 {offsets = [0, 0], sizes = [1, 16], strides = [1, 1]} : vector<8x16xf32> to vector<1x16xf32>
    %92 = vector.broadcast %0 : vector<1x1xf32> to vector<1x16xf32>
    %93 = arith.addf %91, %92 : vector<1x16xf32>
    %c0_40 = arith.constant 0 : index
    %c0_41 = arith.constant 0 : index
    %c0_42 = arith.constant 0 : index
    %94 = vector.load %arg7[%c0_40, %c0_41, %c0_42] : memref<1x2x16xf32, #tpu.memory_space<vmem>>, vector<1x1x16xf32>
    %95 = vector.shape_cast %94 : vector<1x1x16xf32> to vector<1x16xf32>
    %96 = vector.shape_cast %93 : vector<1x16xf32> to vector<1x1x16xf32>
    tpu.vector_store %arg7[%c0_40, %c0_41, %c0_42], %96 {strides = array<i32>} : memref<1x2x16xf32, #tpu.memory_space<vmem>>, vector<1x1x16xf32>,
    %c16 = arith.constant 16 : index
    %c0_43 = arith.constant 0 : index
    %97 = vector.load %arg1[%c16, %c0_43] : memref<32x32xbf16, #tpu.memory_space<vmem>>, vector<16x32xbf16>
    %98 = arith.extf %97 : vector<16x32xbf16> to vector<16x32xf32>
    %c16_44 = arith.constant 16 : index
    %c0_45 = arith.constant 0 : index
    %99 = vector.load %arg2[%c16_44, %c0_45] : memref<32x8xbf16, #tpu.memory_space<vmem>>, vector<16x8xbf16>
    %c0_46 = arith.constant 0 : index
    %c0_47 = arith.constant 0 : index
    %100 = vector.load %arg6[%c0_46, %c0_47] : memref<16x128xf32, #tpu.memory_space<vmem>>, vector<1x32xf32>
    %c1_48 = arith.constant 1 : index
    %c0_49 = arith.constant 0 : index
    %101 = vector.load %arg6[%c1_48, %c0_49] : memref<16x128xf32, #tpu.memory_space<vmem>>, vector<1x32xf32>
    %cst_50 = arith.constant dense<0.000000e+00> : vector<16xf32>
    %102 = vector.multi_reduction <add>, %98, %cst_50 [1] : vector<16x32xf32> to vector<16xf32>
    %103 = vector.shape_cast %102 : vector<16xf32> to vector<16x1xf32>
    %cst_51 = arith.constant 3.200000e+01 : f32
    %104 = vector.broadcast %cst_51 : f32 to vector<16x1xf32>
    %105 = arith.divf %103, %104 : vector<16x1xf32>
    %106 = vector.broadcast %105 : vector<16x1xf32> to vector<16x32xf32>
    %107 = arith.subf %98, %106 : vector<16x32xf32>
    %108 = arith.mulf %107, %107 : vector<16x32xf32>
    %cst_52 = arith.constant dense<0.000000e+00> : vector<16xf32>
    %109 = vector.multi_reduction <add>, %108, %cst_52 [1] : vector<16x32xf32> to vector<16xf32>
    %110 = vector.shape_cast %109 : vector<16xf32> to vector<16x1xf32>
    %cst_53 = arith.constant 3.200000e+01 : f32
    %111 = vector.broadcast %cst_53 : f32 to vector<16x1xf32>
    %112 = arith.divf %110, %111 : vector<16x1xf32>
    %cst_54 = arith.constant 9.99999974E-6 : f32
    %113 = vector.broadcast %cst_54 : f32 to vector<16x1xf32>
    %114 = arith.addf %112, %113 : vector<16x1xf32>
    %115 = math.rsqrt %114 : vector<16x1xf32>
    %116 = vector.broadcast %115 : vector<16x1xf32> to vector<16x32xf32>
    %117 = arith.mulf %107, %116 : vector<16x32xf32>
    %118 = vector.broadcast %100 : vector<1x32xf32> to vector<16x32xf32>
    %119 = arith.mulf %117, %118 : vector<16x32xf32>
    %120 = vector.broadcast %101 : vector<1x32xf32> to vector<16x32xf32>
    %121 = arith.addf %119, %120 : vector<16x32xf32>
    %122 = arith.truncf %121 : vector<16x32xf32> to vector<16x32xbf16>
    %cst_55 = arith.constant dense<0.000000e+00> : vector<16x64xf32>
    %123 = tpu.matmul %122, %1, %cst_55 {dimension_numbers = #tpu.dot_dimension_numbers<[1], [0], [0], [1], [0, 0, 1, 1], [], []>} : vector<16x32xbf16>, vector<32x64xbf16>, vector<16x64xf32> -> vector<16x64xf32>
    %c2_56 = arith.constant 2 : index
    %c0_57 = arith.constant 0 : index
    %124 = vector.load %arg6[%c2_56, %c0_57] : memref<16x128xf32, #tpu.memory_space<vmem>>, vector<1x64xf32>
    %125 = vector.broadcast %124 : vector<1x64xf32> to vector<16x64xf32>
    %126 = arith.addf %123, %125 : vector<16x64xf32>
    %c3_58 = arith.constant 3 : index
    %c0_59 = arith.constant 0 : index
    %127 = vector.load %arg6[%c3_58, %c0_59] : memref<16x128xf32, #tpu.memory_space<vmem>>, vector<1x64xf32>
    %c4_60 = arith.constant 4 : index
    %c0_61 = arith.constant 0 : index
    %128 = vector.load %arg6[%c4_60, %c0_61] : memref<16x128xf32, #tpu.memory_space<vmem>>, vector<1x64xf32>
    %cst_62 = arith.constant dense<0.000000e+00> : vector<16xf32>
    %129 = vector.multi_reduction <add>, %126, %cst_62 [1] : vector<16x64xf32> to vector<16xf32>
    %130 = vector.shape_cast %129 : vector<16xf32> to vector<16x1xf32>
    %cst_63 = arith.constant 6.400000e+01 : f32
    %131 = vector.broadcast %cst_63 : f32 to vector<16x1xf32>
    %132 = arith.divf %130, %131 : vector<16x1xf32>
    %133 = vector.broadcast %132 : vector<16x1xf32> to vector<16x64xf32>
    %134 = arith.subf %126, %133 : vector<16x64xf32>
    %135 = arith.mulf %134, %134 : vector<16x64xf32>
    %cst_64 = arith.constant dense<0.000000e+00> : vector<16xf32>
    %136 = vector.multi_reduction <add>, %135, %cst_64 [1] : vector<16x64xf32> to vector<16xf32>
    %137 = vector.shape_cast %136 : vector<16xf32> to vector<16x1xf32>
    %cst_65 = arith.constant 6.400000e+01 : f32
    %138 = vector.broadcast %cst_65 : f32 to vector<16x1xf32>
    %139 = arith.divf %137, %138 : vector<16x1xf32>
    %cst_66 = arith.constant 9.99999974E-6 : f32
    %140 = vector.broadcast %cst_66 : f32 to vector<16x1xf32>
    %141 = arith.addf %139, %140 : vector<16x1xf32>
    %142 = math.rsqrt %141 : vector<16x1xf32>
    %143 = vector.broadcast %142 : vector<16x1xf32> to vector<16x64xf32>
    %144 = arith.mulf %134, %143 : vector<16x64xf32>
    %145 = vector.broadcast %127 : vector<1x64xf32> to vector<16x64xf32>
    %146 = arith.mulf %144, %145 : vector<16x64xf32>
    %147 = vector.broadcast %128 : vector<1x64xf32> to vector<16x64xf32>
    %148 = arith.addf %146, %147 : vector<16x64xf32>
    %cst_67 = arith.constant 0.000000e+00 : f32
    %149 = vector.broadcast %cst_67 : f32 to vector<16x64xf32>
    %150 = arith.maximumf %148, %149 : vector<16x64xf32>
    %151 = arith.truncf %150 : vector<16x64xf32> to vector<16x64xbf16>
    %cst_68 = arith.constant dense<0.000000e+00> : vector<16x32xf32>
    %152 = tpu.matmul %151, %2, %cst_68 {dimension_numbers = #tpu.dot_dimension_numbers<[1], [0], [0], [1], [0, 0, 1, 1], [], []>} : vector<16x64xbf16>, vector<64x32xbf16>, vector<16x32xf32> -> vector<16x32xf32>
    %cst_69 = arith.constant dense<0.000000e+00> : vector<16x32xf32>
    %153 = tpu.matmul %99, %3, %cst_69 {dimension_numbers = #tpu.dot_dimension_numbers<[1], [0], [0], [1], [0, 0, 1, 1], [], []>} : vector<16x8xbf16>, vector<8x32xbf16>, vector<16x32xf32> -> vector<16x32xf32>
    %154 = arith.addf %152, %153 : vector<16x32xf32>
    %c5_70 = arith.constant 5 : index
    %c0_71 = arith.constant 0 : index
    %155 = vector.load %arg6[%c5_70, %c0_71] : memref<16x128xf32, #tpu.memory_space<vmem>>, vector<1x32xf32>
    %156 = vector.broadcast %155 : vector<1x32xf32> to vector<16x32xf32>
    %157 = arith.addf %154, %156 : vector<16x32xf32>
    %c6_72 = arith.constant 6 : index
    %c0_73 = arith.constant 0 : index
    %158 = vector.load %arg6[%c6_72, %c0_73] : memref<16x128xf32, #tpu.memory_space<vmem>>, vector<1x32xf32>
    %c7_74 = arith.constant 7 : index
    %c0_75 = arith.constant 0 : index
    %159 = vector.load %arg6[%c7_74, %c0_75] : memref<16x128xf32, #tpu.memory_space<vmem>>, vector<1x32xf32>
    %cst_76 = arith.constant dense<0.000000e+00> : vector<16xf32>
    %160 = vector.multi_reduction <add>, %157, %cst_76 [1] : vector<16x32xf32> to vector<16xf32>
    %161 = vector.shape_cast %160 : vector<16xf32> to vector<16x1xf32>
    %cst_77 = arith.constant 3.200000e+01 : f32
    %162 = vector.broadcast %cst_77 : f32 to vector<16x1xf32>
    %163 = arith.divf %161, %162 : vector<16x1xf32>
    %164 = vector.broadcast %163 : vector<16x1xf32> to vector<16x32xf32>
    %165 = arith.subf %157, %164 : vector<16x32xf32>
    %166 = arith.mulf %165, %165 : vector<16x32xf32>
    %cst_78 = arith.constant dense<0.000000e+00> : vector<16xf32>
    %167 = vector.multi_reduction <add>, %166, %cst_78 [1] : vector<16x32xf32> to vector<16xf32>
    %168 = vector.shape_cast %167 : vector<16xf32> to vector<16x1xf32>
    %cst_79 = arith.constant 3.200000e+01 : f32
    %169 = vector.broadcast %cst_79 : f32 to vector<16x1xf32>
    %170 = arith.divf %168, %169 : vector<16x1xf32>
    %cst_80 = arith.constant 9.99999974E-6 : f32
    %171 = vector.broadcast %cst_80 : f32 to vector<16x1xf32>
    %172 = arith.addf %170, %171 : vector<16x1xf32>
    %173 = math.rsqrt %172 : vector<16x1xf32>
    %174 = vector.broadcast %173 : vector<16x1xf32> to vector<16x32xf32>
    %175 = arith.mulf %165, %174 : vector<16x32xf32>
    %176 = vector.broadcast %158 : vector<1x32xf32> to vector<16x32xf32>
    %177 = arith.mulf %175, %176 : vector<16x32xf32>
    %178 = vector.broadcast %159 : vector<1x32xf32> to vector<16x32xf32>
    %179 = arith.addf %177, %178 : vector<16x32xf32>
    %cst_81 = arith.constant 0.000000e+00 : f32
    %180 = vector.broadcast %cst_81 : f32 to vector<16x32xf32>
    %181 = arith.maximumf %179, %180 : vector<16x32xf32>
    %c8_82 = arith.constant 8 : index
    %c0_83 = arith.constant 0 : index
    %182 = vector.load %arg6[%c8_82, %c0_83] : memref<16x128xf32, #tpu.memory_space<vmem>>, vector<8x32xf32>
    %cst_84 = arith.constant dense<0.000000e+00> : vector<8x16xf32>
    %183 = tpu.matmul %182, %181, %cst_84 {dimension_numbers = #tpu.dot_dimension_numbers<[1], [1], [0], [0], [0, 0, 1, 0], [], []>, precision = #tpu.contract_precision<fp32>} : vector<8x32xf32>, vector<16x32xf32>, vector<8x16xf32> -> vector<8x16xf32>
    %184 = vector.extract_strided_slice %183 {offsets = [0, 0], sizes = [1, 16], strides = [1, 1]} : vector<8x16xf32> to vector<1x16xf32>
    %185 = vector.broadcast %0 : vector<1x1xf32> to vector<1x16xf32>
    %186 = arith.addf %184, %185 : vector<1x16xf32>
    %c0_85 = arith.constant 0 : index
    %c1_86 = arith.constant 1 : index
    %c0_87 = arith.constant 0 : index
    %187 = vector.load %arg7[%c0_85, %c1_86, %c0_87] : memref<1x2x16xf32, #tpu.memory_space<vmem>>, vector<1x1x16xf32>
    %188 = vector.shape_cast %187 : vector<1x1x16xf32> to vector<1x16xf32>
    %189 = vector.shape_cast %186 : vector<1x16xf32> to vector<1x1x16xf32>
    tpu.vector_store %arg7[%c0_85, %c1_86, %c0_87], %189 {strides = array<i32>} : memref<1x2x16xf32, #tpu.memory_space<vmem>>, vector<1x1x16xf32>,
    return
  }
  func.func @transform_0(%arg0: i32) -> (i32, i32) {
    %c0_i32 = arith.constant 0 : i32
    %c0_i32_0 = arith.constant 0 : i32
    return %arg0, %c0_i32 : i32, i32
  }
  func.func @transform_1(%arg0: i32) -> (i32, i32) {
    %c0_i32 = arith.constant 0 : i32
    %c0_i32_0 = arith.constant 0 : i32
    return %arg0, %c0_i32 : i32, i32
  }
  func.func @transform_2(%arg0: i32) -> (i32, i32) {
    %c0_i32 = arith.constant 0 : i32
    %c0_i32_0 = arith.constant 0 : i32
    %c0_i32_1 = arith.constant 0 : i32
    return %c0_i32, %c0_i32_0 : i32, i32
  }
  func.func @transform_3(%arg0: i32) -> (i32, i32) {
    %c0_i32 = arith.constant 0 : i32
    %c0_i32_0 = arith.constant 0 : i32
    %c0_i32_1 = arith.constant 0 : i32
    return %c0_i32, %c0_i32_0 : i32, i32
  }
  func.func @transform_4(%arg0: i32) -> (i32, i32) {
    %c0_i32 = arith.constant 0 : i32
    %c0_i32_0 = arith.constant 0 : i32
    %c0_i32_1 = arith.constant 0 : i32
    return %c0_i32, %c0_i32_0 : i32, i32
  }
  func.func @transform_5(%arg0: i32) -> (i32, i32) {
    %c0_i32 = arith.constant 0 : i32
    %c0_i32_0 = arith.constant 0 : i32
    %c0_i32_1 = arith.constant 0 : i32
    return %c0_i32, %c0_i32_0 : i32, i32
  }
  func.func @transform_6(%arg0: i32) -> (i32, i32, i32) {
    %c0_i32 = arith.constant 0 : i32
    %c0_i32_0 = arith.constant 0 : i32
    %c0_i32_1 = arith.constant 0 : i32
    return %arg0, %c0_i32, %c0_i32_0 : i32, i32, i32
  }
}

</mosaic_0001>

<llo_original>
// kernel: tpu_custom_call.1
$region0: #{tpu_custom_call.1}
  #allocation0 [shape = 'u32[]', space=smem, size = 0x4, offset = 0x4, fixed_abs, tag = 'smem constant byte address 0x4 - core index']
  #allocation1 [shape = 'u32[144,128]{1,0:T(1,128)}', space=vmem, size = 0x12000, scoped, tag = 'internal scratch']
  %s0 = inlined_call_operand.vmem [shape: bf16[64,32], index: 0, kind: input, shape index: {}]
  %s1 = inlined_call_operand.vmem [shape: bf16[64,8], index: 1, kind: input, shape index: {}]
  %s2 = inlined_call_operand.vmem [shape: bf16[32,64], index: 2, kind: input, shape index: {}]
  %s3 = inlined_call_operand.vmem [shape: bf16[64,32], index: 3, kind: input, shape index: {}]
  %s4 = inlined_call_operand.vmem [shape: bf16[8,32], index: 4, kind: input, shape index: {}]
  %s5 = inlined_call_operand.vmem [shape: f32[16,128], index: 5, kind: input, shape index: {}]
  %s6 = inlined_call_operand.hbm [shape: f32[2,2,16], index: 6, kind: output, shape index: {}]
  %s7 = sld [smem:[#allocation0]]
  $region57: #{tpu_custom_call.1} parent=0
    _
  %s9 = ssub.s32 1, %s7
  %s10 = scalar_select 0, %s9, %s7
  $region1: #{tpu_custom_call.1} parent=0
    #allocation2 [shape = 'u8[2048]{0}', space=vmem, size = 0x800, scoped, tag = 'output window, operand 0']
    #allocation3 [shape = 's32[2]{0}', space=sflag, size = 0x8, scoped, tag = 'scoped memory for tpu_custom_call.1']
    %11 = vsyncpa [#allocation3], 0
    %s12 = scalar_lea.sflag [#allocation3], 1
    %13 = vsyncpa %s12, 0
    loop: start=0, step=1, limit=4
    $region2: #{tpu_custom_call.1} parent=1 // loop_pre_header
      _
    $region3: #{tpu_custom_call.1} parent=1 // loop_header
      %s15 = sphi 0, %s19
      %p16 = scmp.ge.s32.totalorder %s15, 4
      %s25 = sphi 0, %s27
      %s28 = sphi 0, %s25
      %s29 = sphi 0, %s28
      %s45 = sphi 0, %s29
      %s51 = sphi 0, %s53
      %s54 = sphi 0, %s51
      %s55 = sphi 0, %s54
      %s71 = sphi 0, %s55
      %s75 = sphi 0, %s75
      %s77 = sphi 0, %s75
      %s78 = sphi 0, %s77
      %s92 = sphi 0, %s78
      %s96 = sphi 0, %s96
      %s98 = sphi 0, %s96
      %s99 = sphi 0, %s98
      %s113 = sphi 0, %s99
      %s117 = sphi 0, %s117
      %s119 = sphi 0, %s117
      %s120 = sphi 0, %s119
      %s134 = sphi 0, %s120
      %s138 = sphi 0, %s138
      %s140 = sphi 0, %s138
      %s141 = sphi 0, %s140
      %s155 = sphi 0, %s141
      %s161 = sphi 0, %s163
      %s164 = sphi 0, %s161
      %s165 = sphi 0, %s164
      %s181 = sphi 0, %s165
    $region4: #{tpu_custom_call.1} parent=1 // loop_header_branch
      %18 = sbr.rel (%p16) target = $region8
    $region5: #{tpu_custom_call.1} parent=1 // loop_body
      %s20 = ssub.s32 %s15, 1
      %s21 = ssub.s32 %s15, 2
      %s22 = sadd.s32 %s15, 1
      %s23 = ssub.s32 %s15, %s22
      %p24 = scmp.eq.s32.totalorder %s23, 0
      %s26 = sadd.s32 %s25, 1
      %s27 = scalar_select %p24, %s25, %s26
      %p30 = pneg %p24
      %p31 = scmp.eq.s32.totalorder %s15, 1
      %p32 = por %p30, %p31
      %p33 = scmp.ne.s32.totalorder %s25, %s28
      %p34 = scmp.eq.s32.totalorder %s15, 0
      %p35 = por %p33, %p34
      %p36 = scmp.ne.s32.totalorder %s25, %s28
      %p37 = scmp.eq.s32.totalorder %s20, 1
      %p38 = por %p36, %p37
      %p39 = scmp.ne.s32.totalorder %s28, %s29
      %p40 = scmp.eq.s32.totalorder %s20, 0
      %p41 = por %p39, %p40
      %p42 = scmp.ne.s32.totalorder %s28, %s29
      %p43 = scmp.eq.s32.totalorder %s21, 1
      %p44 = por %p42, %p43
      %p46 = scmp.ne.s32.totalorder %s29, %s45
      %p47 = scmp.eq.s32.totalorder %s21, 0
      %p48 = por %p46, %p47
      %s49 = ssub.s32 %s15, %s22
      %p50 = scmp.eq.s32.totalorder %s49, 0
      %s52 = sadd.s32 %s51, 1
      %s53 = scalar_select %p50, %s51, %s52
      %p56 = pneg %p50
      %p57 = scmp.eq.s32.totalorder %s15, 1
      %p58 = por %p56, %p57
      %p59 = scmp.ne.s32.totalorder %s51, %s54
      %p60 = scmp.eq.s32.totalorder %s15, 0
      %p61 = por %p59, %p60
      %p62 = scmp.ne.s32.totalorder %s51, %s54
      %p63 = scmp.eq.s32.totalorder %s20, 1
      %p64 = por %p62, %p63
      %p65 = scmp.ne.s32.totalorder %s54, %s55
      %p66 = scmp.eq.s32.totalorder %s20, 0
      %p67 = por %p65, %p66
      %p68 = scmp.ne.s32.totalorder %s54, %s55
      %p69 = scmp.eq.s32.totalorder %s21, 1
      %p70 = por %p68, %p69
      %p72 = scmp.ne.s32.totalorder %s55, %s71
      %p73 = scmp.eq.s32.totalorder %s21, 0
      %p74 = por %p72, %p73
      %s76 = sadd.s32 %s75, 1
      %p79 = scmp.eq.s32.totalorder %s15, 1
      %p80 = scmp.ne.s32.totalorder %s75, %s77
      %p81 = scmp.eq.s32.totalorder %s15, 0
      %p82 = por %p80, %p81
      %p83 = scmp.ne.s32.totalorder %s75, %s77
      %p84 = scmp.eq.s32.totalorder %s20, 1
      %p85 = por %p83, %p84
      %p86 = scmp.ne.s32.totalorder %s77, %s78
      %p87 = scmp.eq.s32.totalorder %s20, 0
      %p88 = por %p86, %p87
      %p89 = scmp.ne.s32.totalorder %s77, %s78
      %p90 = scmp.eq.s32.totalorder %s21, 1
      %p91 = por %p89, %p90
      %p93 = scmp.ne.s32.totalorder %s78, %s92
      %p94 = scmp.eq.s32.totalorder %s21, 0
      %p95 = por %p93, %p94
      %s97 = sadd.s32 %s96, 1
      %p100 = scmp.eq.s32.totalorder %s15, 1
      %p101 = scmp.ne.s32.totalorder %s96, %s98
      %p102 = scmp.eq.s32.totalorder %s15, 0
      %p103 = por %p101, %p102
      %p104 = scmp.ne.s32.totalorder %s96, %s98
      %p105 = scmp.eq.s32.totalorder %s20, 1
      %p106 = por %p104, %p105
      %p107 = scmp.ne.s32.totalorder %s98, %s99
      %p108 = scmp.eq.s32.totalorder %s20, 0
      %p109 = por %p107, %p108
      %p110 = scmp.ne.s32.totalorder %s98, %s99
      %p111 = scmp.eq.s32.totalorder %s21, 1
      %p112 = por %p110, %p111
      %p114 = scmp.ne.s32.totalorder %s99, %s113
      %p115 = scmp.eq.s32.totalorder %s21, 0
      %p116 = por %p114, %p115
      %s118 = sadd.s32 %s117, 1
      %p121 = scmp.eq.s32.totalorder %s15, 1
      %p122 = scmp.ne.s32.totalorder %s117, %s119
      %p123 = scmp.eq.s32.totalorder %s15, 0
      %p124 = por %p122, %p123
      %p125 = scmp.ne.s32.totalorder %s117, %s119
      %p126 = scmp.eq.s32.totalorder %s20, 1
      %p127 = por %p125, %p126
      %p128 = scmp.ne.s32.totalorder %s119, %s120
      %p129 = scmp.eq.s32.totalorder %s20, 0
      %p130 = por %p128, %p129
      %p131 = scmp.ne.s32.totalorder %s119, %s120
      %p132 = scmp.eq.s32.totalorder %s21, 1
      %p133 = por %p131, %p132
      %p135 = scmp.ne.s32.totalorder %s120, %s134
      %p136 = scmp.eq.s32.totalorder %s21, 0
      %p137 = por %p135, %p136
      %s139 = sadd.s32 %s138, 1
      %p142 = scmp.eq.s32.totalorder %s15, 1
      %p143 = scmp.ne.s32.totalorder %s138, %s140
      %p144 = scmp.eq.s32.totalorder %s15, 0
      %p145 = por %p143, %p144
      %p146 = scmp.ne.s32.totalorder %s138, %s140
      %p147 = scmp.eq.s32.totalorder %s20, 1
      %p148 = por %p146, %p147
      %p149 = scmp.ne.s32.totalorder %s140, %s141
      %p150 = scmp.eq.s32.totalorder %s20, 0
      %p151 = por %p149, %p150
      %p152 = scmp.ne.s32.totalorder %s140, %s141
      %p153 = scmp.eq.s32.totalorder %s21, 1
      %p154 = por %p152, %p153
      %p156 = scmp.ne.s32.totalorder %s141, %s155
      %p157 = scmp.eq.s32.totalorder %s21, 0
      %p158 = por %p156, %p157
      %s159 = ssub.s32 %s15, %s22
      %p160 = scmp.eq.s32.totalorder %s159, 0
      %s162 = sadd.s32 %s161, 1
      %s163 = scalar_select %p160, %s161, %s162
      %p166 = pneg %p160
      %p167 = scmp.eq.s32.totalorder %s15, 1
      %p168 = por %p166, %p167
      %p169 = scmp.ne.s32.totalorder %s161, %s164
      %p170 = scmp.eq.s32.totalorder %s15, 0
      %p171 = por %p169, %p170
      %p172 = scmp.ne.s32.totalorder %s161, %s164
      %p173 = scmp.eq.s32.totalorder %s20, 1
      %p174 = por %p172, %p173
      %p175 = scmp.ne.s32.totalorder %s164, %s165
      %p176 = scmp.eq.s32.totalorder %s20, 0
      %p177 = por %p175, %p176
      %p178 = scmp.ne.s32.totalorder %s164, %s165
      %p179 = scmp.eq.s32.totalorder %s21, 1
      %p180 = por %p178, %p179
      %p182 = scmp.ne.s32.totalorder %s165, %s181
      %p183 = scmp.eq.s32.totalorder %s21, 0
      %p184 = por %p182, %p183
      %p185 = scmp.le.s32.totalorder 1, %s15
      %p186 = scmp.lt.s32.totalorder %s15, 3
      %p187 = pnand %p185, %p186
      %p188 = pneg %p187
      // Predicated region
      $region9: #{tpu_custom_call.1} parent=5 // pred_check
        _
      $region10: #{tpu_custom_call.1} parent=5 // pred_check_branch
        %190 = sbr.rel (%p187) target = $region12
      $region11: #{tpu_custom_call.1} parent=5 // pred_region
        %s191 = ssub.s32 %s15, 1
        // Predicated region
        $region13: #{tpu_custom_call.1} parent=11 // pred_check
          %p192 = pneg %p88
        $region14: #{tpu_custom_call.1} parent=11 // pred_check_branch
          %194 = sbr.rel (%p192) target = $region16
        $region15: #{tpu_custom_call.1} parent=11 // pred_region
          _
        $region16: #{tpu_custom_call.1} parent=11 // pred_fallthru
          _
        // Predicated region
        $region17: #{tpu_custom_call.1} parent=11 // pred_check
          %p195 = pneg %p109
        $region18: #{tpu_custom_call.1} parent=11 // pred_check_branch
          %197 = sbr.rel (%p195) target = $region20
        $region19: #{tpu_custom_call.1} parent=11 // pred_region
          _
        $region20: #{tpu_custom_call.1} parent=11 // pred_fallthru
          _
        // Predicated region
        $region21: #{tpu_custom_call.1} parent=11 // pred_check
          %p198 = pneg %p130
        $region22: #{tpu_custom_call.1} parent=11 // pred_check_branch
          %200 = sbr.rel (%p198) target = $region24
        $region23: #{tpu_custom_call.1} parent=11 // pred_region
          _
        $region24: #{tpu_custom_call.1} parent=11 // pred_fallthru
          _
        // Predicated region
        $region25: #{tpu_custom_call.1} parent=11 // pred_check
          %p201 = pneg %p151
        $region26: #{tpu_custom_call.1} parent=11 // pred_check_branch
          %203 = sbr.rel (%p201) target = $region28
        $region27: #{tpu_custom_call.1} parent=11 // pred_region
          _
        $region28: #{tpu_custom_call.1} parent=11 // pred_fallthru
          _
      $region12: #{tpu_custom_call.1} parent=5 // pred_fallthru
        _
      %p204 = scmp.lt.s32.totalorder %s15, 2
      // Predicated region
      $region29: #{tpu_custom_call.1} parent=5 // pred_check
        %p205 = pneg %p204
      $region30: #{tpu_custom_call.1} parent=5 // pred_check_branch
        %207 = sbr.rel (%p205) target = $region32
      $region31: #{tpu_custom_call.1} parent=5 // pred_region
        // Predicated region
        $region33: #{tpu_custom_call.1} parent=31 // pred_check
          %p208 = pneg %p35
        $region34: #{tpu_custom_call.1} parent=31 // pred_check_branch
          %210 = sbr.rel (%p208) target = $region36
        $region35: #{tpu_custom_call.1} parent=31 // pred_region
          %s211 = smul.u32 4, %s15
          %p212 = scmp.lt.s32.totalorder %s211, 7
          %s213 = scalar_select %p212, %s211, 7
          %s214 = smul.addr %s213, 4
          %s215 = scalar_lea.vmem %s0, %s214
          %s216 = smul.u32 4, %s15
        $region36: #{tpu_custom_call.1} parent=31 // pred_fallthru
          _
        // Predicated region
        $region37: #{tpu_custom_call.1} parent=31 // pred_check
          %p217 = pneg %p61
        $region38: #{tpu_custom_call.1} parent=31 // pred_check_branch
          %219 = sbr.rel (%p217) target = $region40
        $region39: #{tpu_custom_call.1} parent=31 // pred_region
          %s220 = smul.u32 4, %s15
          %p221 = scmp.lt.s32.totalorder %s220, 7
          %s222 = scalar_select %p221, %s220, 7
          %s223 = smul.addr %s222, 4
          %s224 = scalar_lea.vmem %s1, %s223
          %s225 = smul.u32 4, %s15
        $region40: #{tpu_custom_call.1} parent=31 // pred_fallthru
          _
      $region32: #{tpu_custom_call.1} parent=5 // pred_fallthru
        _
      %p226 = scmp.le.s32.totalorder 1, %s15
      %p227 = scmp.lt.s32.totalorder %s15, 3
      %p228 = pnand %p226, %p227
      %p229 = pneg %p228
      // Predicated region
      $region41: #{tpu_custom_call.1} parent=5 // pred_check
        _
      $region42: #{tpu_custom_call.1} parent=5 // pred_check_branch
        %231 = sbr.rel (%p228) target = $region44
      $region43: #{tpu_custom_call.1} parent=5 // pred_region
        %s232 = ssub.s32 %s15, 1
        %s233 = smul.u32 4, %s20
        %p234 = scmp.lt.s32.totalorder %s233, 7
        %s235 = scalar_select %p234, %s233, 7
        %s236 = smul.addr %s235, 4
        %s237 = scalar_lea.vmem %s0, %s236
        %p238 = pneg %p41
        %p239 = pneg %p38
        %s240 = smul.u32 4, %s20
        %p241 = scmp.lt.s32.totalorder %s240, 7
        %s242 = scalar_select %p241, %s240, 7
        %s243 = smul.addr %s242, 4
        %s244 = scalar_lea.vmem %s1, %s243
        %p245 = pneg %p67
        %p246 = pneg %p64
        %p247 = pneg %p88
        %p248 = pneg %p85
        %p249 = pneg %p109
        %p250 = pneg %p106
        %p251 = pneg %p130
        %p252 = pneg %p127
        %p253 = pneg %p151
        %p254 = pneg %p148
        %p255 = pneg %p177
        %p256 = pneg %p174
        %s257 = sand.u32 %s164, 1
        %s258 = scalar_lea.sflag [#allocation3], %s257
        %s259 = sand.u32 %s164, 1
        %s260 = smul.addr %s259, 2
        %s261 = scalar_lea.vmem [#allocation2], %s260
        %s262 = smul.u32 4, %s20
        %p263 = scmp.lt.s32.totalorder %s262, 7
        %s264 = scalar_select %p263, %s262, 7
        %s265 = smul.addr %s264, 4
        %s266 = scalar_lea.vmem %s0, %s265
        %s267 = smul.u32 4, %s20
        %s268 = smul.u32 4, %s20
        %p269 = scmp.lt.s32.totalorder %s268, 7
        %s270 = scalar_select %p269, %s268, 7
        %s271 = smul.addr %s270, 4
        %s272 = scalar_lea.vmem %s1, %s271
        %s273 = smul.u32 4, %s20
        %v275 = vld [vmem:[%s5 + $0x9] sm:$0x1]
        %v276 = vld [vmem:[%s2] sm:$0xf]
        %v277 = vld [vmem:[%s2 + $0x4] sm:$0xf]
        %v278 = vld [vmem:[%s2 + $0x8] sm:$0xf]
        %v279 = vld [vmem:[%s2 + $0xc] sm:$0xf]
        %v280 = vld [vmem:[%s3] sm:$0xf]
        %v281 = vld [vmem:[%s3 + $0x4] sm:$0xf]
        %v282 = vld [vmem:[%s3 + $0x8] sm:$0xf]
        %v283 = vld [vmem:[%s3 + $0xc] sm:$0xf]
        %v284 = vld [vmem:[%s3 + $0x10] sm:$0xf]
        %v285 = vld [vmem:[%s3 + $0x14] sm:$0xf]
        %v286 = vld [vmem:[%s3 + $0x18] sm:$0xf]
        %v287 = vld [vmem:[%s3 + $0x1c] sm:$0xf]
        %v288 = vld [vmem:[%s4] sm:$0xf]
        %v289 = vld [vmem:[%s266] sm:$0xf]
        %v290 = vld [vmem:[%s266 + $0x4] sm:$0xf]
        %v291 = vunpack.c.l.bf16 %v289
        %v292 = vunpack.c.l.bf16 %v290
        %v293 = vld [vmem:[%s272] sm:$0xf]
        %v294 = vld [vmem:[%s272 + $0x4] sm:$0xf]
        %v295 = vld [vmem:[%s5] sm:$0x1]
        %v296 = vld [vmem:[%s5 + $0x1] sm:$0x1]
        %vm297 = vcmask 261120
        %v298 = vsel %vm297, %v291, 0.0
        %299 = vadd.xlane.f32.xlu0 %v298
        %v300 = vpop.xlane.xlu0 %299
        %v301 = vsel %vm297, %v292, 0.0
        %302 = vadd.xlane.f32.xlu0 %v301
        %v303 = vpop.xlane.xlu0 %302
        %v304 = vrcp.pop 32.0
        %v305 = vmul.f32 %v300, %v304
        %v306 = vmul.f32 %v303, %v304
        %v307 = vsub.f32 %v291, %v305
        %v308 = vsub.f32 %v292, %v306
        %v309 = vmul.f32 %v307, %v307
        %v310 = vmul.f32 %v308, %v308
        %v311 = vsel %vm297, %v309, 0.0
        %312 = vadd.xlane.f32.xlu0 %v311
        %v313 = vpop.xlane.xlu0 %312
        %v314 = vsel %vm297, %v310, 0.0
        %315 = vadd.xlane.f32.xlu0 %v314
        %v316 = vpop.xlane.xlu0 %315
        %v317 = vmul.f32 %v313, %v304
        %v318 = vmul.f32 %v316, %v304
        %v319 = vadd.f32 %v317, 1e-05
        %v320 = vadd.f32 %v318, 1e-05
        %v321 = vrsqrt.pop %v319
        %v322 = vrsqrt.pop %v320
        %v323 = vmul.f32 %v307, %v321
        %v324 = vmul.f32 %v308, %v322
        %v325 = vlaneseq
        %v326 = vshrl.u32 %v325, 7
        %v327 = vsub.s32 0, %v326
        %v328 = vrot.slane %v295, %v327
        %v329 = vmul.f32 %v323, %v328
        %v330 = vmul.f32 %v324, %v328
        %v331 = vlaneseq
        %v332 = vshrl.u32 %v331, 7
        %v333 = vsub.s32 0, %v332
        %v334 = vrot.slane %v296, %v333
        %v335 = vadd.f32 %v329, %v334
        %v336 = vadd.f32 %v330, %v334
        %v337 = vpack.c.bf16 %v336, %v335
        %v338 = vld [vmem:[%s5 + $0x2] sm:$0x1]
        %v339 = vlaneseq
        %v340 = vshrl.u32 %v339, 7
        %v341 = vsub.s32 0, %v340
        %v342 = vrot.slane %v338, %v341
        %v347 = vunpack.c.l.b16 %v276
        %v348 = vunpack.c.l.b16 %v277
        %v349 = vunpack.c.l.b16 %v278
        %v350 = vunpack.c.l.b16 %v279
        %v351 = vpack.c.b16 %v348, %v347
        %v352 = vpack.c.b16 %v350, %v349
        %v356 = vsel %vm297, %v337, 0
        %358 = vmatprep.subr.bf16.mxu0 0
        %359 = vmatpush1.bf16.msra.mxu0 0
        %360 = vmatprep.subr.bf16.mxu0 0
        %361 = vmatpush1.bf16.msra.mxu0 0
        %362 = vmatprep.subr.bf16.mxu0 0
        %363 = vmatpush1.bf16.msra.mxu0 0
        %364 = vmatprep.subr.bf16.mxu0 0
        %365 = vmatpush1.bf16.msra.mxu0 0
        %366 = vmatprep.subr.bf16.mxu0 0
        %367 = vmatpush1.bf16.msra.mxu0 0
        %368 = vmatprep.subr.bf16.mxu0 0
        %369 = vmatpush1.bf16.msra.mxu0 0
        %370 = vmatprep.subr.bf16.mxu0 0
        %371 = vmatpush1.bf16.msra.mxu0 %v352
        %372 = vmatprep.subr.bf16.mxu0 0
        %373 = vmatpush1.bf16.msra.mxu0 %v351
        %374 = vmatprep.subr.bf16.mxu0 0
        %375 = vmatpush2.bf16.msra.mxu0 0
        %376 = vmatprep.subr.bf16.mxu0 0
        %377 = vmatpush2.bf16.msra.mxu0 0
        %378 = vmatprep.subr.bf16.mxu0 0
        %379 = vmatpush2.bf16.msra.mxu0 0
        %380 = vmatprep.subr.bf16.mxu0 0
        %381 = vmatpush2.bf16.msra.mxu0 0
        %382 = vmatprep.subr.bf16.mxu0 0
        %383 = vmatpush2.bf16.msra.mxu0 0
        %384 = vmatprep.subr.bf16.mxu0 0
        %385 = vmatpush2.bf16.msra.mxu0 0
        %386 = vmatprep.subr.bf16.mxu0 0
        %387 = vmatpush2.bf16.msra.mxu0 0
        %388 = vmatprep.subr.bf16.mxu0 0
        %389 = vmatpush2.bf16.msra.mxu0 0
        %390 = vmatprep.mubr.bf16.mxu0 0
        %391 = vmatmul.mubr.bf16.gmra.mxu0 %v356
        %v392 = vpop.f32.mrf.mxu0
        %v393 = vadd.f32 %v342, %v392
        %v394 = vpop.f32.mrf.mxu0
        %v395 = vpop.f32.mrf.mxu0
        %v396 = vadd.f32 %v342, %v395
        %v397 = vpop.f32.mrf.mxu0
        %398 = vdwg.mxu0
        %v399 = vld [vmem:[%s5 + $0x3] sm:$0x1]
        %v400 = vld [vmem:[%s5 + $0x4] sm:$0x1]
        %vm401 = vcmask 523264
        %v402 = vsel %vm401, %v393, 0.0
        %403 = vadd.xlane.f32.xlu0 %v402
        %v404 = vpop.xlane.xlu0 %403
        %v405 = vsel %vm401, %v396, 0.0
        %406 = vadd.xlane.f32.xlu0 %v405
        %v407 = vpop.xlane.xlu0 %406
        %v408 = vrcp.pop 64.0
        %v409 = vmul.f32 %v404, %v408
        %v410 = vmul.f32 %v407, %v408
        %v411 = vsub.f32 %v393, %v409
        %v412 = vsub.f32 %v396, %v410
        %v413 = vmul.f32 %v411, %v411
        %v414 = vmul.f32 %v412, %v412
        %v415 = vsel %vm401, %v413, 0.0
        %416 = vadd.xlane.f32.xlu0 %v415
        %v417 = vpop.xlane.xlu0 %416
        %v418 = vsel %vm401, %v414, 0.0
        %419 = vadd.xlane.f32.xlu0 %v418
        %v420 = vpop.xlane.xlu0 %419
        %v421 = vmul.f32 %v417, %v408
        %v422 = vmul.f32 %v420, %v408
        %v423 = vadd.f32 %v421, 1e-05
        %v424 = vadd.f32 %v422, 1e-05
        %v425 = vrsqrt.pop %v423
        %v426 = vrsqrt.pop %v424
        %v427 = vmul.f32 %v411, %v425
        %v428 = vmul.f32 %v412, %v426
        %v429 = vlaneseq
        %v430 = vshrl.u32 %v429, 7
        %v431 = vsub.s32 0, %v430
        %v432 = vrot.slane %v399, %v431
        %v433 = vmul.f32 %v427, %v432
        %v434 = vmul.f32 %v428, %v432
        %v435 = vlaneseq
        %v436 = vshrl.u32 %v435, 7
        %v437 = vsub.s32 0, %v436
        %v438 = vrot.slane %v400, %v437
        %v439 = vadd.f32 %v433, %v438
        %v440 = vadd.f32 %v434, %v438
        %v441 = vmax.f32 %v439, 0.0
        %v442 = vmax.f32 %v440, 0.0
        %v443 = vpack.c.bf16 %v442, %v441
        %v446 = vunpack.c.l.b16 %v293
        %v447 = vunpack.c.l.b16 %v294
        %v448 = vpack.c.b16 %v447, %v446
        %vm449 = vcmask 64512
        %v451 = vsel %vm449, %v448, 0
        %vm453 = vcmask 1043456
        %v455 = vsel %vm453, %v288, 0
        %457 = vmatprep.subr.bf16.mxu0 0
        %458 = vmatpush1.bf16.msra.mxu0 0
        %459 = vmatprep.subr.bf16.mxu0 0
        %460 = vmatpush1.bf16.msra.mxu0 0
        %461 = vmatprep.subr.bf16.mxu0 0
        %462 = vmatpush1.bf16.msra.mxu0 0
        %463 = vmatprep.subr.bf16.mxu0 0
        %464 = vmatpush1.bf16.msra.mxu0 0
        %465 = vmatprep.subr.bf16.mxu0 0
        %466 = vmatpush1.bf16.msra.mxu0 0
        %467 = vmatprep.subr.bf16.mxu0 0
        %468 = vmatpush1.bf16.msra.mxu0 0
        %469 = vmatprep.subr.bf16.mxu0 0
        %470 = vmatpush1.bf16.msra.mxu0 0
        %471 = vmatprep.subr.bf16.mxu0 0
        %472 = vmatpush1.bf16.msra.mxu0 %v455
        %473 = vmatprep.subr.bf16.mxu0 0
        %474 = vmatpush2.bf16.msra.mxu0 0
        %475 = vmatprep.subr.bf16.mxu0 0
        %476 = vmatpush2.bf16.msra.mxu0 0
        %477 = vmatprep.subr.bf16.mxu0 0
        %478 = vmatpush2.bf16.msra.mxu0 0
        %479 = vmatprep.subr.bf16.mxu0 0
        %480 = vmatpush2.bf16.msra.mxu0 0
        %481 = vmatprep.subr.bf16.mxu0 0
        %482 = vmatpush2.bf16.msra.mxu0 0
        %483 = vmatprep.subr.bf16.mxu0 0
        %484 = vmatpush2.bf16.msra.mxu0 0
        %485 = vmatprep.subr.bf16.mxu0 0
        %486 = vmatpush2.bf16.msra.mxu0 0
        %487 = vmatprep.subr.bf16.mxu0 0
        %488 = vmatpush2.bf16.msra.mxu0 0
        %489 = vmatprep.mubr.bf16.mxu0 0
        %490 = vmatmul.mubr.bf16.gmra.mxu0 %v451
        %v491 = vpop.f32.mrf.mxu0
        %v492 = vadd.f32 0.0, %v491
        %v493 = vpop.f32.mrf.mxu0
        %v494 = vpop.f32.mrf.mxu0
        %v495 = vadd.f32 0.0, %v494
        %v496 = vpop.f32.mrf.mxu0
        %497 = vdwg.mxu0
        %v506 = vunpack.c.l.b16 %v280
        %v507 = vunpack.c.l.b16 %v281
        %v508 = vunpack.c.l.b16 %v282
        %v509 = vunpack.c.l.b16 %v283
        %v510 = vunpack.c.l.b16 %v284
        %v511 = vunpack.c.l.b16 %v285
        %v512 = vunpack.c.l.b16 %v286
        %v513 = vunpack.c.l.b16 %v287
        %v514 = vpack.c.b16 %v507, %v506
        %v515 = vpack.c.b16 %v509, %v508
        %v516 = vpack.c.b16 %v511, %v510
        %v517 = vpack.c.b16 %v513, %v512
        %v523 = vsel %vm401, %v443, 0
        %525 = vmatprep.subr.bf16.mxu0 0
        %526 = vmatpush1.bf16.msra.mxu0 0
        %527 = vmatprep.subr.bf16.mxu0 0
        %528 = vmatpush1.bf16.msra.mxu0 0
        %529 = vmatprep.subr.bf16.mxu0 0
        %530 = vmatpush1.bf16.msra.mxu0 0
        %531 = vmatprep.subr.bf16.mxu0 0
        %532 = vmatpush1.bf16.msra.mxu0 0
        %533 = vmatprep.subr.bf16.mxu0 0
        %534 = vmatpush1.bf16.msra.mxu0 %v517
        %535 = vmatprep.subr.bf16.mxu0 0
        %536 = vmatpush1.bf16.msra.mxu0 %v516
        %537 = vmatprep.subr.bf16.mxu0 0
        %538 = vmatpush1.bf16.msra.mxu0 %v515
        %539 = vmatprep.subr.bf16.mxu0 0
        %540 = vmatpush1.bf16.msra.mxu0 %v514
        %541 = vmatprep.subr.bf16.mxu0 0
        %542 = vmatpush2.bf16.msra.mxu0 0
        %543 = vmatprep.subr.bf16.mxu0 0
        %544 = vmatpush2.bf16.msra.mxu0 0
        %545 = vmatprep.subr.bf16.mxu0 0
        %546 = vmatpush2.bf16.msra.mxu0 0
        %547 = vmatprep.subr.bf16.mxu0 0
        %548 = vmatpush2.bf16.msra.mxu0 0
        %549 = vmatprep.subr.bf16.mxu0 0
        %550 = vmatpush2.bf16.msra.mxu0 0
        %551 = vmatprep.subr.bf16.mxu0 0
        %552 = vmatpush2.bf16.msra.mxu0 0
        %553 = vmatprep.subr.bf16.mxu0 0
        %554 = vmatpush2.bf16.msra.mxu0 0
        %555 = vmatprep.subr.bf16.mxu0 0
        %556 = vmatpush2.bf16.msra.mxu0 0
        %557 = vmatprep.mubr.bf16.mxu0 0
        %558 = vmatmul.mubr.bf16.gmra.mxu0 %v523
        %v559 = vpop.f32.mrf.mxu0
        %v560 = vadd.f32 %v492, %v559
        %v561 = vpop.f32.mrf.mxu0
        %v562 = vpop.f32.mrf.mxu0
        %v563 = vadd.f32 %v495, %v562
        %v564 = vpop.f32.mrf.mxu0
        %565 = vdwg.mxu0
        %v566 = vld [vmem:[%s5 + $0x5] sm:$0x1]
        %v567 = vlaneseq
        %v568 = vshrl.u32 %v567, 7
        %v569 = vsub.s32 0, %v568
        %v570 = vrot.slane %v566, %v569
        %v571 = vadd.f32 %v560, %v570
        %v572 = vadd.f32 %v563, %v570
        %v573 = vld [vmem:[%s5 + $0x6] sm:$0x1]
        %v574 = vld [vmem:[%s5 + $0x7] sm:$0x1]
        %v575 = vsel %vm297, %v571, 0.0
        %576 = vadd.xlane.f32.xlu0 %v575
        %v577 = vpop.xlane.xlu0 %576
        %v578 = vsel %vm297, %v572, 0.0
        %579 = vadd.xlane.f32.xlu0 %v578
        %v580 = vpop.xlane.xlu0 %579
        %v581 = vmul.f32 %v577, %v304
        %v582 = vmul.f32 %v580, %v304
        %v583 = vsub.f32 %v571, %v581
        %v584 = vsub.f32 %v572, %v582
        %v585 = vmul.f32 %v583, %v583
        %v586 = vmul.f32 %v584, %v584
        %v587 = vsel %vm297, %v585, 0.0
        %588 = vadd.xlane.f32.xlu0 %v587
        %v589 = vpop.xlane.xlu0 %588
        %v590 = vsel %vm297, %v586, 0.0
        %591 = vadd.xlane.f32.xlu0 %v590
        %v592 = vpop.xlane.xlu0 %591
        %v593 = vmul.f32 %v589, %v304
        %v594 = vmul.f32 %v592, %v304
        %v595 = vadd.f32 %v593, 1e-05
        %v596 = vadd.f32 %v594, 1e-05
        %v597 = vrsqrt.pop %v595
        %v598 = vrsqrt.pop %v596
        %v599 = vmul.f32 %v583, %v597
        %v600 = vmul.f32 %v584, %v598
        %v601 = vlaneseq
        %v602 = vshrl.u32 %v601, 7
        %v603 = vsub.s32 0, %v602
        %v604 = vrot.slane %v573, %v603
        %v605 = vmul.f32 %v599, %v604
        %v606 = vmul.f32 %v600, %v604
        %v607 = vlaneseq
        %v608 = vshrl.u32 %v607, 7
        %v609 = vsub.s32 0, %v608
        %v610 = vrot.slane %v574, %v609
        %v611 = vadd.f32 %v605, %v610
        %v612 = vadd.f32 %v606, %v610
        %v613 = vmax.f32 %v611, 0.0
        %v614 = vmax.f32 %v612, 0.0
        %v615 = vld [vmem:[%s5 + $0x8] sm:$0xff]
        %v617 = vsel %vm297, %v615, 0
        %v620 = vsel %vm297, %v613, 0
        %v623 = vsel %vm297, %v614, 0
        %625 = vmatprep.subr.mxu0 0.0
        %626 = vmatpush1.xpose.msra.mxu0 0.0
        %627 = vmatprep.subr.mxu0 0.0
        %628 = vmatpush1.xpose.msra.mxu0 0.0
        %629 = vmatprep.subr.mxu0 0.0
        %630 = vmatpush1.xpose.msra.mxu0 0.0
        %631 = vmatprep.subr.mxu0 0.0
        %632 = vmatpush1.xpose.msra.mxu0 0.0
        %633 = vmatprep.subr.mxu0 0.0
        %634 = vmatpush1.xpose.msra.mxu0 0.0
        %635 = vmatprep.subr.mxu0 0.0
        %636 = vmatpush1.xpose.msra.mxu0 0.0
        %637 = vmatprep.subr.mxu0 0.0
        %638 = vmatpush1.xpose.msra.mxu0 0.0
        %639 = vmatprep.subr.mxu0 0.0
        %640 = vmatpush1.xpose.msra.mxu0 0.0
        %641 = vmatprep.subr.mxu0 0.0
        %642 = vmatpush1.xpose.msra.mxu0 0.0
        %643 = vmatprep.subr.mxu0 0.0
        %644 = vmatpush1.xpose.msra.mxu0 0.0
        %645 = vmatprep.subr.mxu0 0.0
        %646 = vmatpush1.xpose.msra.mxu0 0.0
        %647 = vmatprep.subr.mxu0 0.0
        %648 = vmatpush1.xpose.msra.mxu0 0.0
        %649 = vmatprep.subr.mxu0 0.0
        %650 = vmatpush1.xpose.msra.mxu0 0.0
        %651 = vmatprep.subr.mxu0 0.0
        %652 = vmatpush1.xpose.msra.mxu0 0.0
        %653 = vmatprep.subr.mxu0 0.0
        %v654 = vand.u32 %v623, 4294901760
        %655 = vmatpush1.xpose.msra.mxu0 %v654
        %656 = vmatprep.subr.mxu0 0.0
        %v657 = vand.u32 %v620, 4294901760
        %658 = vmatpush1.xpose.msra.mxu0 %v657
        %659 = vmatprep.subr.mxu0 0.0
        %660 = vmatpush2.xpose.msra.mxu0 0.0
        %661 = vmatprep.subr.mxu0 0.0
        %662 = vmatpush2.xpose.msra.mxu0 0.0
        %663 = vmatprep.subr.mxu0 0.0
        %664 = vmatpush2.xpose.msra.mxu0 0.0
        %665 = vmatprep.subr.mxu0 0.0
        %666 = vmatpush2.xpose.msra.mxu0 0.0
        %667 = vmatprep.subr.mxu0 0.0
        %668 = vmatpush2.xpose.msra.mxu0 0.0
        %669 = vmatprep.subr.mxu0 0.0
        %670 = vmatpush2.xpose.msra.mxu0 0.0
        %671 = vmatprep.subr.mxu0 0.0
        %672 = vmatpush2.xpose.msra.mxu0 0.0
        %673 = vmatprep.subr.mxu0 0.0
        %674 = vmatpush2.xpose.msra.mxu0 0.0
        %675 = vmatprep.subr.mxu0 0.0
        %676 = vmatpush2.xpose.msra.mxu0 0.0
        %677 = vmatprep.subr.mxu0 0.0
        %678 = vmatpush2.xpose.msra.mxu0 0.0
        %679 = vmatprep.subr.mxu0 0.0
        %680 = vmatpush2.xpose.msra.mxu0 0.0
        %681 = vmatprep.subr.mxu0 0.0
        %682 = vmatpush2.xpose.msra.mxu0 0.0
        %683 = vmatprep.subr.mxu0 0.0
        %684 = vmatpush2.xpose.msra.mxu0 0.0
        %685 = vmatprep.subr.mxu0 0.0
        %686 = vmatpush2.xpose.msra.mxu0 0.0
        %687 = vmatprep.subr.mxu0 0.0
        %688 = vmatpush2.xpose.msra.mxu0 0.0
        %689 = vmatprep.subr.mxu0 0.0
        %690 = vmatpush2.xpose.msra.mxu0 0.0
        %691 = vmatprep.mubr.f32.mxu0 0.0
        %v692 = vand.u32 %v617, 4294901760
        %v693 = vsub.f32 %v617, %v692
        %v694 = vand.u32 %v693, 4294901760
        %v695 = vsub.f32 %v693, %v694
        %v696 = vand.u32 %v695, 4294901760
        %697 = vmatmul.mubr.f32.gmra.mxu0 %v696
        %v698 = vpop.f32.mrf.mxu0
        %v699 = vadd.f32 0.0, %v698
        %v700 = vpop.f32.mrf.mxu0
        %701 = vdwg.mxu0
        %702 = vmatprep.subr.mxu0 0.0
        %703 = vmatpush1.xpose.msra.mxu0 0.0
        %704 = vmatprep.subr.mxu0 0.0
        %705 = vmatpush1.xpose.msra.mxu0 0.0
        %706 = vmatprep.subr.mxu0 0.0
        %707 = vmatpush1.xpose.msra.mxu0 0.0
        %708 = vmatprep.subr.mxu0 0.0
        %709 = vmatpush1.xpose.msra.mxu0 0.0
        %710 = vmatprep.subr.mxu0 0.0
        %711 = vmatpush1.xpose.msra.mxu0 0.0
        %712 = vmatprep.subr.mxu0 0.0
        %713 = vmatpush1.xpose.msra.mxu0 0.0
        %714 = vmatprep.subr.mxu0 0.0
        %715 = vmatpush1.xpose.msra.mxu0 0.0
        %716 = vmatprep.subr.mxu0 0.0
        %717 = vmatpush1.xpose.msra.mxu0 0.0
        %718 = vmatprep.subr.mxu0 0.0
        %719 = vmatpush1.xpose.msra.mxu0 0.0
        %720 = vmatprep.subr.mxu0 0.0
        %721 = vmatpush1.xpose.msra.mxu0 0.0
        %722 = vmatprep.subr.mxu0 0.0
        %723 = vmatpush1.xpose.msra.mxu0 0.0
        %724 = vmatprep.subr.mxu0 0.0
        %725 = vmatpush1.xpose.msra.mxu0 0.0
        %726 = vmatprep.subr.mxu0 0.0
        %727 = vmatpush1.xpose.msra.mxu0 0.0
        %728 = vmatprep.subr.mxu0 0.0
        %729 = vmatpush1.xpose.msra.mxu0 0.0
        %730 = vmatprep.subr.mxu0 0.0
        %v731 = vand.u32 %v623, 4294901760
        %v732 = vsub.f32 %v623, %v731
        %v733 = vand.u32 %v732, 4294901760
        %v734 = vsub.f32 %v732, %v733
        %v735 = vand.u32 %v734, 4294901760
        %736 = vmatpush1.xpose.msra.mxu0 %v735
        %737 = vmatprep.subr.mxu0 0.0
        %v738 = vand.u32 %v620, 4294901760
        %v739 = vsub.f32 %v620, %v738
        %v740 = vand.u32 %v739, 4294901760
        %v741 = vsub.f32 %v739, %v740
        %v742 = vand.u32 %v741, 4294901760
        %743 = vmatpush1.xpose.msra.mxu0 %v742
        %744 = vmatprep.subr.mxu0 0.0
        %745 = vmatpush2.xpose.msra.mxu0 0.0
        %746 = vmatprep.subr.mxu0 0.0
        %747 = vmatpush2.xpose.msra.mxu0 0.0
        %748 = vmatprep.subr.mxu0 0.0
        %749 = vmatpush2.xpose.msra.mxu0 0.0
        %750 = vmatprep.subr.mxu0 0.0
        %751 = vmatpush2.xpose.msra.mxu0 0.0
        %752 = vmatprep.subr.mxu0 0.0
        %753 = vmatpush2.xpose.msra.mxu0 0.0
        %754 = vmatprep.subr.mxu0 0.0
        %755 = vmatpush2.xpose.msra.mxu0 0.0
        %756 = vmatprep.subr.mxu0 0.0
        %757 = vmatpush2.xpose.msra.mxu0 0.0
        %758 = vmatprep.subr.mxu0 0.0
        %759 = vmatpush2.xpose.msra.mxu0 0.0
        %760 = vmatprep.subr.mxu0 0.0
        %761 = vmatpush2.xpose.msra.mxu0 0.0
        %762 = vmatprep.subr.mxu0 0.0
        %763 = vmatpush2.xpose.msra.mxu0 0.0
        %764 = vmatprep.subr.mxu0 0.0
        %765 = vmatpush2.xpose.msra.mxu0 0.0
        %766 = vmatprep.subr.mxu0 0.0
        %767 = vmatpush2.xpose.msra.mxu0 0.0
        %768 = vmatprep.subr.mxu0 0.0
        %769 = vmatpush2.xpose.msra.mxu0 0.0
        %770 = vmatprep.subr.mxu0 0.0
        %771 = vmatpush2.xpose.msra.mxu0 0.0
        %772 = vmatprep.subr.mxu0 0.0
        %773 = vmatpush2.xpose.msra.mxu0 0.0
        %774 = vmatprep.subr.mxu0 0.0
        %775 = vmatpush2.xpose.msra.mxu0 0.0
        %776 = vmatprep.mubr.f32.mxu0 0.0
        %v777 = vand.u32 %v617, 4294901760
        %778 = vmatmul.mubr.f32.gmra.mxu0 %v777
        %v779 = vpop.f32.mrf.mxu0
        %v780 = vadd.f32 %v699, %v779
        %v781 = vpop.f32.mrf.mxu0
        %782 = vdwg.mxu0
        %783 = vmatprep.subr.mxu0 0.0
        %784 = vmatpush1.xpose.msra.mxu0 0.0
        %785 = vmatprep.subr.mxu0 0.0
        %786 = vmatpush1.xpose.msra.mxu0 0.0
        %787 = vmatprep.subr.mxu0 0.0
        %788 = vmatpush1.xpose.msra.mxu0 0.0
        %789 = vmatprep.subr.mxu0 0.0
        %790 = vmatpush1.xpose.msra.mxu0 0.0
        %791 = vmatprep.subr.mxu0 0.0
        %792 = vmatpush1.xpose.msra.mxu0 0.0
        %793 = vmatprep.subr.mxu0 0.0
        %794 = vmatpush1.xpose.msra.mxu0 0.0
        %795 = vmatprep.subr.mxu0 0.0
        %796 = vmatpush1.xpose.msra.mxu0 0.0
        %797 = vmatprep.subr.mxu0 0.0
        %798 = vmatpush1.xpose.msra.mxu0 0.0
        %799 = vmatprep.subr.mxu0 0.0
        %800 = vmatpush1.xpose.msra.mxu0 0.0
        %801 = vmatprep.subr.mxu0 0.0
        %802 = vmatpush1.xpose.msra.mxu0 0.0
        %803 = vmatprep.subr.mxu0 0.0
        %804 = vmatpush1.xpose.msra.mxu0 0.0
        %805 = vmatprep.subr.mxu0 0.0
        %806 = vmatpush1.xpose.msra.mxu0 0.0
        %807 = vmatprep.subr.mxu0 0.0
        %808 = vmatpush1.xpose.msra.mxu0 0.0
        %809 = vmatprep.subr.mxu0 0.0
        %810 = vmatpush1.xpose.msra.mxu0 0.0
        %811 = vmatprep.subr.mxu0 0.0
        %v812 = vand.u32 %v623, 4294901760
        %v813 = vsub.f32 %v623, %v812
        %814 = vmatpush1.xpose.msra.mxu0 %v813
        %815 = vmatprep.subr.mxu0 0.0
        %v816 = vand.u32 %v620, 4294901760
        %v817 = vsub.f32 %v620, %v816
        %818 = vmatpush1.xpose.msra.mxu0 %v817
        %819 = vmatprep.subr.mxu0 0.0
        %820 = vmatpush2.xpose.msra.mxu0 0.0
        %821 = vmatprep.subr.mxu0 0.0
        %822 = vmatpush2.xpose.msra.mxu0 0.0
        %823 = vmatprep.subr.mxu0 0.0
        %824 = vmatpush2.xpose.msra.mxu0 0.0
        %825 = vmatprep.subr.mxu0 0.0
        %826 = vmatpush2.xpose.msra.mxu0 0.0
        %827 = vmatprep.subr.mxu0 0.0
        %828 = vmatpush2.xpose.msra.mxu0 0.0
        %829 = vmatprep.subr.mxu0 0.0
        %830 = vmatpush2.xpose.msra.mxu0 0.0
        %831 = vmatprep.subr.mxu0 0.0
        %832 = vmatpush2.xpose.msra.mxu0 0.0
        %833 = vmatprep.subr.mxu0 0.0
        %834 = vmatpush2.xpose.msra.mxu0 0.0
        %835 = vmatprep.subr.mxu0 0.0
        %836 = vmatpush2.xpose.msra.mxu0 0.0
        %837 = vmatprep.subr.mxu0 0.0
        %838 = vmatpush2.xpose.msra.mxu0 0.0
        %839 = vmatprep.subr.mxu0 0.0
        %840 = vmatpush2.xpose.msra.mxu0 0.0
        %841 = vmatprep.subr.mxu0 0.0
        %842 = vmatpush2.xpose.msra.mxu0 0.0
        %843 = vmatprep.subr.mxu0 0.0
        %844 = vmatpush2.xpose.msra.mxu0 0.0
        %845 = vmatprep.subr.mxu0 0.0
        %846 = vmatpush2.xpose.msra.mxu0 0.0
        %847 = vmatprep.subr.mxu0 0.0
        %848 = vmatpush2.xpose.msra.mxu0 0.0
        %849 = vmatprep.subr.mxu0 0.0
        %850 = vmatpush2.xpose.msra.mxu0 0.0
        %851 = vmatprep.mubr.f32.mxu0 0.0
        %v852 = vand.u32 %v617, 4294901760
        %v853 = vsub.f32 %v617, %v852
        %854 = vmatmul.mubr.f32.gmra.mxu0 %v853
        %v855 = vpop.f32.mrf.mxu0
        %v856 = vadd.f32 %v780, %v855
        %v857 = vpop.f32.mrf.mxu0
        %858 = vdwg.mxu0
        %859 = vmatprep.subr.mxu0 0.0
        %860 = vmatpush1.xpose.msra.mxu0 0.0
        %861 = vmatprep.subr.mxu0 0.0
        %862 = vmatpush1.xpose.msra.mxu0 0.0
        %863 = vmatprep.subr.mxu0 0.0
        %864 = vmatpush1.xpose.msra.mxu0 0.0
        %865 = vmatprep.subr.mxu0 0.0
        %866 = vmatpush1.xpose.msra.mxu0 0.0
        %867 = vmatprep.subr.mxu0 0.0
        %868 = vmatpush1.xpose.msra.mxu0 0.0
        %869 = vmatprep.subr.mxu0 0.0
        %870 = vmatpush1.xpose.msra.mxu0 0.0
        %871 = vmatprep.subr.mxu0 0.0
        %872 = vmatpush1.xpose.msra.mxu0 0.0
        %873 = vmatprep.subr.mxu0 0.0
        %874 = vmatpush1.xpose.msra.mxu0 0.0
        %875 = vmatprep.subr.mxu0 0.0
        %876 = vmatpush1.xpose.msra.mxu0 0.0
        %877 = vmatprep.subr.mxu0 0.0
        %878 = vmatpush1.xpose.msra.mxu0 0.0
        %879 = vmatprep.subr.mxu0 0.0
        %880 = vmatpush1.xpose.msra.mxu0 0.0
        %881 = vmatprep.subr.mxu0 0.0
        %882 = vmatpush1.xpose.msra.mxu0 0.0
        %883 = vmatprep.subr.mxu0 0.0
        %884 = vmatpush1.xpose.msra.mxu0 0.0
        %885 = vmatprep.subr.mxu0 0.0
        %886 = vmatpush1.xpose.msra.mxu0 0.0
        %887 = vmatprep.subr.mxu0 0.0
        %v888 = vand.u32 %v623, 4294901760
        %889 = vmatpush1.xpose.msra.mxu0 %v888
        %890 = vmatprep.subr.mxu0 0.0
        %v891 = vand.u32 %v620, 4294901760
        %892 = vmatpush1.xpose.msra.mxu0 %v891
        %893 = vmatprep.subr.mxu0 0.0
        %894 = vmatpush2.xpose.msra.mxu0 0.0
        %895 = vmatprep.subr.mxu0 0.0
        %896 = vmatpush2.xpose.msra.mxu0 0.0
        %897 = vmatprep.subr.mxu0 0.0
        %898 = vmatpush2.xpose.msra.mxu0 0.0
        %899 = vmatprep.subr.mxu0 0.0
        %900 = vmatpush2.xpose.msra.mxu0 0.0
        %901 = vmatprep.subr.mxu0 0.0
        %902 = vmatpush2.xpose.msra.mxu0 0.0
        %903 = vmatprep.subr.mxu0 0.0
        %904 = vmatpush2.xpose.msra.mxu0 0.0
        %905 = vmatprep.subr.mxu0 0.0
        %906 = vmatpush2.xpose.msra.mxu0 0.0
        %907 = vmatprep.subr.mxu0 0.0
        %908 = vmatpush2.xpose.msra.mxu0 0.0
        %909 = vmatprep.subr.mxu0 0.0
        %910 = vmatpush2.xpose.msra.mxu0 0.0
        %911 = vmatprep.subr.mxu0 0.0
        %912 = vmatpush2.xpose.msra.mxu0 0.0
        %913 = vmatprep.subr.mxu0 0.0
        %914 = vmatpush2.xpose.msra.mxu0 0.0
        %915 = vmatprep.subr.mxu0 0.0
        %916 = vmatpush2.xpose.msra.mxu0 0.0
        %917 = vmatprep.subr.mxu0 0.0
        %918 = vmatpush2.xpose.msra.mxu0 0.0
        %919 = vmatprep.subr.mxu0 0.0
        %920 = vmatpush2.xpose.msra.mxu0 0.0
        %921 = vmatprep.subr.mxu0 0.0
        %922 = vmatpush2.xpose.msra.mxu0 0.0
        %923 = vmatprep.subr.mxu0 0.0
        %924 = vmatpush2.xpose.msra.mxu0 0.0
        %925 = vmatprep.mubr.f32.mxu0 0.0
        %v926 = vand.u32 %v617, 4294901760
        %v927 = vsub.f32 %v617, %v926
        %v928 = vand.u32 %v927, 4294901760
        %929 = vmatmul.mubr.f32.gmra.mxu0 %v928
        %v930 = vpop.f32.mrf.mxu0
        %v931 = vadd.f32 %v856, %v930
        %v932 = vpop.f32.mrf.mxu0
        %933 = vdwg.mxu0
        %934 = vmatprep.subr.mxu0 0.0
        %935 = vmatpush1.xpose.msra.mxu0 0.0
        %936 = vmatprep.subr.mxu0 0.0
        %937 = vmatpush1.xpose.msra.mxu0 0.0
        %938 = vmatprep.subr.mxu0 0.0
        %939 = vmatpush1.xpose.msra.mxu0 0.0
        %940 = vmatprep.subr.mxu0 0.0
        %941 = vmatpush1.xpose.msra.mxu0 0.0
        %942 = vmatprep.subr.mxu0 0.0
        %943 = vmatpush1.xpose.msra.mxu0 0.0
        %944 = vmatprep.subr.mxu0 0.0
        %945 = vmatpush1.xpose.msra.mxu0 0.0
        %946 = vmatprep.subr.mxu0 0.0
        %947 = vmatpush1.xpose.msra.mxu0 0.0
        %948 = vmatprep.subr.mxu0 0.0
        %949 = vmatpush1.xpose.msra.mxu0 0.0
        %950 = vmatprep.subr.mxu0 0.0
        %951 = vmatpush1.xpose.msra.mxu0 0.0
        %952 = vmatprep.subr.mxu0 0.0
        %953 = vmatpush1.xpose.msra.mxu0 0.0
        %954 = vmatprep.subr.mxu0 0.0
        %955 = vmatpush1.xpose.msra.mxu0 0.0
        %956 = vmatprep.subr.mxu0 0.0
        %957 = vmatpush1.xpose.msra.mxu0 0.0
        %958 = vmatprep.subr.mxu0 0.0
        %959 = vmatpush1.xpose.msra.mxu0 0.0
        %960 = vmatprep.subr.mxu0 0.0
        %961 = vmatpush1.xpose.msra.mxu0 0.0
        %962 = vmatprep.subr.mxu0 0.0
        %v963 = vand.u32 %v623, 4294901760
        %v964 = vsub.f32 %v623, %v963
        %v965 = vand.u32 %v964, 4294901760
        %966 = vmatpush1.xpose.msra.mxu0 %v965
        %967 = vmatprep.subr.mxu0 0.0
        %v968 = vand.u32 %v620, 4294901760
        %v969 = vsub.f32 %v620, %v968
        %v970 = vand.u32 %v969, 4294901760
        %971 = vmatpush1.xpose.msra.mxu0 %v970
        %972 = vmatprep.subr.mxu0 0.0
        %973 = vmatpush2.xpose.msra.mxu0 0.0
        %974 = vmatprep.subr.mxu0 0.0
        %975 = vmatpush2.xpose.msra.mxu0 0.0
        %976 = vmatprep.subr.mxu0 0.0
        %977 = vmatpush2.xpose.msra.mxu0 0.0
        %978 = vmatprep.subr.mxu0 0.0
        %979 = vmatpush2.xpose.msra.mxu0 0.0
        %980 = vmatprep.subr.mxu0 0.0
        %981 = vmatpush2.xpose.msra.mxu0 0.0
        %982 = vmatprep.subr.mxu0 0.0
        %983 = vmatpush2.xpose.msra.mxu0 0.0
        %984 = vmatprep.subr.mxu0 0.0
        %985 = vmatpush2.xpose.msra.mxu0 0.0
        %986 = vmatprep.subr.mxu0 0.0
        %987 = vmatpush2.xpose.msra.mxu0 0.0
        %988 = vmatprep.subr.mxu0 0.0
        %989 = vmatpush2.xpose.msra.mxu0 0.0
        %990 = vmatprep.subr.mxu0 0.0
        %991 = vmatpush2.xpose.msra.mxu0 0.0
        %992 = vmatprep.subr.mxu0 0.0
        %993 = vmatpush2.xpose.msra.mxu0 0.0
        %994 = vmatprep.subr.mxu0 0.0
        %995 = vmatpush2.xpose.msra.mxu0 0.0
        %996 = vmatprep.subr.mxu0 0.0
        %997 = vmatpush2.xpose.msra.mxu0 0.0
        %998 = vmatprep.subr.mxu0 0.0
        %999 = vmatpush2.xpose.msra.mxu0 0.0
        %1000 = vmatprep.subr.mxu0 0.0
        %1001 = vmatpush2.xpose.msra.mxu0 0.0
        %1002 = vmatprep.subr.mxu0 0.0
        %1003 = vmatpush2.xpose.msra.mxu0 0.0
        %1004 = vmatprep.mubr.f32.mxu0 0.0
        %v1005 = vand.u32 %v617, 4294901760
        %1006 = vmatmul.mubr.f32.gmra.mxu0 %v1005
        %v1007 = vpop.f32.mrf.mxu0
        %v1008 = vadd.f32 %v931, %v1007
        %v1009 = vpop.f32.mrf.mxu0
        %1010 = vdwg.mxu0
        %1011 = vmatprep.subr.mxu0 0.0
        %1012 = vmatpush1.xpose.msra.mxu0 0.0
        %1013 = vmatprep.subr.mxu0 0.0
        %1014 = vmatpush1.xpose.msra.mxu0 0.0
        %1015 = vmatprep.subr.mxu0 0.0
        %1016 = vmatpush1.xpose.msra.mxu0 0.0
        %1017 = vmatprep.subr.mxu0 0.0
        %1018 = vmatpush1.xpose.msra.mxu0 0.0
        %1019 = vmatprep.subr.mxu0 0.0
        %1020 = vmatpush1.xpose.msra.mxu0 0.0
        %1021 = vmatprep.subr.mxu0 0.0
        %1022 = vmatpush1.xpose.msra.mxu0 0.0
        %1023 = vmatprep.subr.mxu0 0.0
        %1024 = vmatpush1.xpose.msra.mxu0 0.0
        %1025 = vmatprep.subr.mxu0 0.0
        %1026 = vmatpush1.xpose.msra.mxu0 0.0
        %1027 = vmatprep.subr.mxu0 0.0
        %1028 = vmatpush1.xpose.msra.mxu0 0.0
        %1029 = vmatprep.subr.mxu0 0.0
        %1030 = vmatpush1.xpose.msra.mxu0 0.0
        %1031 = vmatprep.subr.mxu0 0.0
        %1032 = vmatpush1.xpose.msra.mxu0 0.0
        %1033 = vmatprep.subr.mxu0 0.0
        %1034 = vmatpush1.xpose.msra.mxu0 0.0
        %1035 = vmatprep.subr.mxu0 0.0
        %1036 = vmatpush1.xpose.msra.mxu0 0.0
        %1037 = vmatprep.subr.mxu0 0.0
        %1038 = vmatpush1.xpose.msra.mxu0 0.0
        %1039 = vmatprep.subr.mxu0 0.0
        %v1040 = vand.u32 %v623, 4294901760
        %1041 = vmatpush1.xpose.msra.mxu0 %v1040
        %1042 = vmatprep.subr.mxu0 0.0
        %v1043 = vand.u32 %v620, 4294901760
        %1044 = vmatpush1.xpose.msra.mxu0 %v1043
        %1045 = vmatprep.subr.mxu0 0.0
        %1046 = vmatpush2.xpose.msra.mxu0 0.0
        %1047 = vmatprep.subr.mxu0 0.0
        %1048 = vmatpush2.xpose.msra.mxu0 0.0
        %1049 = vmatprep.subr.mxu0 0.0
        %1050 = vmatpush2.xpose.msra.mxu0 0.0
        %1051 = vmatprep.subr.mxu0 0.0
        %1052 = vmatpush2.xpose.msra.mxu0 0.0
        %1053 = vmatprep.subr.mxu0 0.0
        %1054 = vmatpush2.xpose.msra.mxu0 0.0
        %1055 = vmatprep.subr.mxu0 0.0
        %1056 = vmatpush2.xpose.msra.mxu0 0.0
        %1057 = vmatprep.subr.mxu0 0.0
        %1058 = vmatpush2.xpose.msra.mxu0 0.0
        %1059 = vmatprep.subr.mxu0 0.0
        %1060 = vmatpush2.xpose.msra.mxu0 0.0
        %1061 = vmatprep.subr.mxu0 0.0
        %1062 = vmatpush2.xpose.msra.mxu0 0.0
        %1063 = vmatprep.subr.mxu0 0.0
        %1064 = vmatpush2.xpose.msra.mxu0 0.0
        %1065 = vmatprep.subr.mxu0 0.0
        %1066 = vmatpush2.xpose.msra.mxu0 0.0
        %1067 = vmatprep.subr.mxu0 0.0
        %1068 = vmatpush2.xpose.msra.mxu0 0.0
        %1069 = vmatprep.subr.mxu0 0.0
        %1070 = vmatpush2.xpose.msra.mxu0 0.0
        %1071 = vmatprep.subr.mxu0 0.0
        %1072 = vmatpush2.xpose.msra.mxu0 0.0
        %1073 = vmatprep.subr.mxu0 0.0
        %1074 = vmatpush2.xpose.msra.mxu0 0.0
        %1075 = vmatprep.subr.mxu0 0.0
        %1076 = vmatpush2.xpose.msra.mxu0 0.0
        %1077 = vmatprep.mubr.f32.mxu0 0.0
        %v1078 = vand.u32 %v617, 4294901760
        %1079 = vmatmul.mubr.f32.gmra.mxu0 %v1078
        %v1080 = vpop.f32.mrf.mxu0
        %v1081 = vadd.f32 %v1008, %v1080
        %v1082 = vpop.f32.mrf.mxu0
        %1083 = vdwg.mxu0
        %1085 = vset.pattern.permute.xlu0 0
        %1086 = vperm.xlu0 %1085, %v275
        %v1087 = vpop.permute.xlu0 %1086
        %v1089 = vadd.f32 %v1081, %v1087
        %vm1090 = vcmask 122880
        %1091 = vst.msk [vmem:[%s261] sm:$0x1] %vm1090, %v1089
        %v1092 = vld [vmem:[%s266 + $0x8] sm:$0xf]
        %v1093 = vld [vmem:[%s266 + $0xc] sm:$0xf]
        %v1094 = vunpack.c.l.bf16 %v1092
        %v1095 = vunpack.c.l.bf16 %v1093
        %v1096 = vld [vmem:[%s272 + $0x8] sm:$0xf]
        %v1097 = vld [vmem:[%s272 + $0xc] sm:$0xf]
        %v1098 = vld [vmem:[%s5] sm:$0x1]
        %v1099 = vld [vmem:[%s5 + $0x1] sm:$0x1]
        %v1100 = vsel %vm297, %v1094, 0.0
        %1101 = vadd.xlane.f32.xlu0 %v1100
        %v1102 = vpop.xlane.xlu0 %1101
        %v1103 = vsel %vm297, %v1095, 0.0
        %1104 = vadd.xlane.f32.xlu0 %v1103
        %v1105 = vpop.xlane.xlu0 %1104
        %v1106 = vmul.f32 %v1102, %v304
        %v1107 = vmul.f32 %v1105, %v304
        %v1108 = vsub.f32 %v1094, %v1106
        %v1109 = vsub.f32 %v1095, %v1107
        %v1110 = vmul.f32 %v1108, %v1108
        %v1111 = vmul.f32 %v1109, %v1109
        %v1112 = vsel %vm297, %v1110, 0.0
        %1113 = vadd.xlane.f32.xlu0 %v1112
        %v1114 = vpop.xlane.xlu0 %1113
        %v1115 = vsel %vm297, %v1111, 0.0
        %1116 = vadd.xlane.f32.xlu0 %v1115
        %v1117 = vpop.xlane.xlu0 %1116
        %v1118 = vmul.f32 %v1114, %v304
        %v1119 = vmul.f32 %v1117, %v304
        %v1120 = vadd.f32 %v1118, 1e-05
        %v1121 = vadd.f32 %v1119, 1e-05
        %v1122 = vrsqrt.pop %v1120
        %v1123 = vrsqrt.pop %v1121
        %v1124 = vmul.f32 %v1108, %v1122
        %v1125 = vmul.f32 %v1109, %v1123
        %v1126 = vlaneseq
        %v1127 = vshrl.u32 %v1126, 7
        %v1128 = vsub.s32 0, %v1127
        %v1129 = vrot.slane %v1098, %v1128
        %v1130 = vmul.f32 %v1124, %v1129
        %v1131 = vmul.f32 %v1125, %v1129
        %v1132 = vlaneseq
        %v1133 = vshrl.u32 %v1132, 7
        %v1134 = vsub.s32 0, %v1133
        %v1135 = vrot.slane %v1099, %v1134
        %v1136 = vadd.f32 %v1130, %v1135
        %v1137 = vadd.f32 %v1131, %v1135
        %v1138 = vpack.c.bf16 %v1137, %v1136
        %v1139 = vld [vmem:[%s5 + $0x2] sm:$0x1]
        %v1140 = vlaneseq
        %v1141 = vshrl.u32 %v1140, 7
        %v1142 = vsub.s32 0, %v1141
        %v1143 = vrot.slane %v1139, %v1142
        %v1145 = vsel %vm297, %v1138, 0
        %1147 = vmatprep.subr.bf16.mxu0 0
        %1148 = vmatpush1.bf16.msra.mxu0 0
        %1149 = vmatprep.subr.bf16.mxu0 0
        %1150 = vmatpush1.bf16.msra.mxu0 0
        %1151 = vmatprep.subr.bf16.mxu0 0
        %1152 = vmatpush1.bf16.msra.mxu0 0
        %1153 = vmatprep.subr.bf16.mxu0 0
        %1154 = vmatpush1.bf16.msra.mxu0 0
        %1155 = vmatprep.subr.bf16.mxu0 0
        %1156 = vmatpush1.bf16.msra.mxu0 0
        %1157 = vmatprep.subr.bf16.mxu0 0
        %1158 = vmatpush1.bf16.msra.mxu0 0
        %1159 = vmatprep.subr.bf16.mxu0 0
        %1160 = vmatpush1.bf16.msra.mxu0 %v352
        %1161 = vmatprep.subr.bf16.mxu0 0
        %1162 = vmatpush1.bf16.msra.mxu0 %v351
        %1163 = vmatprep.subr.bf16.mxu0 0
        %1164 = vmatpush2.bf16.msra.mxu0 0
        %1165 = vmatprep.subr.bf16.mxu0 0
        %1166 = vmatpush2.bf16.msra.mxu0 0
        %1167 = vmatprep.subr.bf16.mxu0 0
        %1168 = vmatpush2.bf16.msra.mxu0 0
        %1169 = vmatprep.subr.bf16.mxu0 0
        %1170 = vmatpush2.bf16.msra.mxu0 0
        %1171 = vmatprep.subr.bf16.mxu0 0
        %1172 = vmatpush2.bf16.msra.mxu0 0
        %1173 = vmatprep.subr.bf16.mxu0 0
        %1174 = vmatpush2.bf16.msra.mxu0 0
        %1175 = vmatprep.subr.bf16.mxu0 0
        %1176 = vmatpush2.bf16.msra.mxu0 0
        %1177 = vmatprep.subr.bf16.mxu0 0
        %1178 = vmatpush2.bf16.msra.mxu0 0
        %1179 = vmatprep.mubr.bf16.mxu0 0
        %1180 = vmatmul.mubr.bf16.gmra.mxu0 %v1145
        %v1181 = vpop.f32.mrf.mxu0
        %v1182 = vadd.f32 %v1143, %v1181
        %v1183 = vpop.f32.mrf.mxu0
        %v1184 = vpop.f32.mrf.mxu0
        %v1185 = vadd.f32 %v1143, %v1184
        %v1186 = vpop.f32.mrf.mxu0
        %1187 = vdwg.mxu0
        %v1188 = vld [vmem:[%s5 + $0x3] sm:$0x1]
        %v1189 = vld [vmem:[%s5 + $0x4] sm:$0x1]
        %v1190 = vsel %vm401, %v1182, 0.0
        %1191 = vadd.xlane.f32.xlu0 %v1190
        %v1192 = vpop.xlane.xlu0 %1191
        %v1193 = vsel %vm401, %v1185, 0.0
        %1194 = vadd.xlane.f32.xlu0 %v1193
        %v1195 = vpop.xlane.xlu0 %1194
        %v1196 = vmul.f32 %v1192, %v408
        %v1197 = vmul.f32 %v1195, %v408
        %v1198 = vsub.f32 %v1182, %v1196
        %v1199 = vsub.f32 %v1185, %v1197
        %v1200 = vmul.f32 %v1198, %v1198
        %v1201 = vmul.f32 %v1199, %v1199
        %v1202 = vsel %vm401, %v1200, 0.0
        %1203 = vadd.xlane.f32.xlu0 %v1202
        %v1204 = vpop.xlane.xlu0 %1203
        %v1205 = vsel %vm401, %v1201, 0.0
        %1206 = vadd.xlane.f32.xlu0 %v1205
        %v1207 = vpop.xlane.xlu0 %1206
        %v1208 = vmul.f32 %v1204, %v408
        %v1209 = vmul.f32 %v1207, %v408
        %v1210 = vadd.f32 %v1208, 1e-05
        %v1211 = vadd.f32 %v1209, 1e-05
        %v1212 = vrsqrt.pop %v1210
        %v1213 = vrsqrt.pop %v1211
        %v1214 = vmul.f32 %v1198, %v1212
        %v1215 = vmul.f32 %v1199, %v1213
        %v1216 = vlaneseq
        %v1217 = vshrl.u32 %v1216, 7
        %v1218 = vsub.s32 0, %v1217
        %v1219 = vrot.slane %v1188, %v1218
        %v1220 = vmul.f32 %v1214, %v1219
        %v1221 = vmul.f32 %v1215, %v1219
        %v1222 = vlaneseq
        %v1223 = vshrl.u32 %v1222, 7
        %v1224 = vsub.s32 0, %v1223
        %v1225 = vrot.slane %v1189, %v1224
        %v1226 = vadd.f32 %v1220, %v1225
        %v1227 = vadd.f32 %v1221, %v1225
        %v1228 = vmax.f32 %v1226, 0.0
        %v1229 = vmax.f32 %v1227, 0.0
        %v1230 = vpack.c.bf16 %v1229, %v1228
        %v1233 = vunpack.c.l.b16 %v1096
        %v1234 = vunpack.c.l.b16 %v1097
        %v1235 = vpack.c.b16 %v1234, %v1233
        %v1237 = vsel %vm449, %v1235, 0
        %1239 = vmatprep.subr.bf16.mxu0 0
        %1240 = vmatpush1.bf16.msra.mxu0 0
        %1241 = vmatprep.subr.bf16.mxu0 0
        %1242 = vmatpush1.bf16.msra.mxu0 0
        %1243 = vmatprep.subr.bf16.mxu0 0
        %1244 = vmatpush1.bf16.msra.mxu0 0
        %1245 = vmatprep.subr.bf16.mxu0 0
        %1246 = vmatpush1.bf16.msra.mxu0 0
        %1247 = vmatprep.subr.bf16.mxu0 0
        %1248 = vmatpush1.bf16.msra.mxu0 0
        %1249 = vmatprep.subr.bf16.mxu0 0
        %1250 = vmatpush1.bf16.msra.mxu0 0
        %1251 = vmatprep.subr.bf16.mxu0 0
        %1252 = vmatpush1.bf16.msra.mxu0 0
        %1253 = vmatprep.subr.bf16.mxu0 0
        %1254 = vmatpush1.bf16.msra.mxu0 %v455
        %1255 = vmatprep.subr.bf16.mxu0 0
        %1256 = vmatpush2.bf16.msra.mxu0 0
        %1257 = vmatprep.subr.bf16.mxu0 0
        %1258 = vmatpush2.bf16.msra.mxu0 0
        %1259 = vmatprep.subr.bf16.mxu0 0
        %1260 = vmatpush2.bf16.msra.mxu0 0
        %1261 = vmatprep.subr.bf16.mxu0 0
        %1262 = vmatpush2.bf16.msra.mxu0 0
        %1263 = vmatprep.subr.bf16.mxu0 0
        %1264 = vmatpush2.bf16.msra.mxu0 0
        %1265 = vmatprep.subr.bf16.mxu0 0
        %1266 = vmatpush2.bf16.msra.mxu0 0
        %1267 = vmatprep.subr.bf16.mxu0 0
        %1268 = vmatpush2.bf16.msra.mxu0 0
        %1269 = vmatprep.subr.bf16.mxu0 0
        %1270 = vmatpush2.bf16.msra.mxu0 0
        %1271 = vmatprep.mubr.bf16.mxu0 0
        %1272 = vmatmul.mubr.bf16.gmra.mxu0 %v1237
        %v1273 = vpop.f32.mrf.mxu0
        %v1274 = vadd.f32 0.0, %v1273
        %v1275 = vpop.f32.mrf.mxu0
        %v1276 = vpop.f32.mrf.mxu0
        %v1277 = vadd.f32 0.0, %v1276
        %v1278 = vpop.f32.mrf.mxu0
        %1279 = vdwg.mxu0
        %v1281 = vsel %vm401, %v1230, 0
        %1283 = vmatprep.subr.bf16.mxu0 0
        %1284 = vmatpush1.bf16.msra.mxu0 0
        %1285 = vmatprep.subr.bf16.mxu0 0
        %1286 = vmatpush1.bf16.msra.mxu0 0
        %1287 = vmatprep.subr.bf16.mxu0 0
        %1288 = vmatpush1.bf16.msra.mxu0 0
        %1289 = vmatprep.subr.bf16.mxu0 0
        %1290 = vmatpush1.bf16.msra.mxu0 0
        %1291 = vmatprep.subr.bf16.mxu0 0
        %1292 = vmatpush1.bf16.msra.mxu0 %v517
        %1293 = vmatprep.subr.bf16.mxu0 0
        %1294 = vmatpush1.bf16.msra.mxu0 %v516
        %1295 = vmatprep.subr.bf16.mxu0 0
        %1296 = vmatpush1.bf16.msra.mxu0 %v515
        %1297 = vmatprep.subr.bf16.mxu0 0
        %1298 = vmatpush1.bf16.msra.mxu0 %v514
        %1299 = vmatprep.subr.bf16.mxu0 0
        %1300 = vmatpush2.bf16.msra.mxu0 0
        %1301 = vmatprep.subr.bf16.mxu0 0
        %1302 = vmatpush2.bf16.msra.mxu0 0
        %1303 = vmatprep.subr.bf16.mxu0 0
        %1304 = vmatpush2.bf16.msra.mxu0 0
        %1305 = vmatprep.subr.bf16.mxu0 0
        %1306 = vmatpush2.bf16.msra.mxu0 0
        %1307 = vmatprep.subr.bf16.mxu0 0
        %1308 = vmatpush2.bf16.msra.mxu0 0
        %1309 = vmatprep.subr.bf16.mxu0 0
        %1310 = vmatpush2.bf16.msra.mxu0 0
        %1311 = vmatprep.subr.bf16.mxu0 0
        %1312 = vmatpush2.bf16.msra.mxu0 0
        %1313 = vmatprep.subr.bf16.mxu0 0
        %1314 = vmatpush2.bf16.msra.mxu0 0
        %1315 = vmatprep.mubr.bf16.mxu0 0
        %1316 = vmatmul.mubr.bf16.gmra.mxu0 %v1281
        %v1317 = vpop.f32.mrf.mxu0
        %v1318 = vadd.f32 %v1274, %v1317
        %v1319 = vpop.f32.mrf.mxu0
        %v1320 = vpop.f32.mrf.mxu0
        %v1321 = vadd.f32 %v1277, %v1320
        %v1322 = vpop.f32.mrf.mxu0
        %1323 = vdwg.mxu0
        %v1324 = vld [vmem:[%s5 + $0x5] sm:$0x1]
        %v1325 = vlaneseq
        %v1326 = vshrl.u32 %v1325, 7
        %v1327 = vsub.s32 0, %v1326
        %v1328 = vrot.slane %v1324, %v1327
        %v1329 = vadd.f32 %v1318, %v1328
        %v1330 = vadd.f32 %v1321, %v1328
        %v1331 = vld [vmem:[%s5 + $0x6] sm:$0x1]
        %v1332 = vld [vmem:[%s5 + $0x7] sm:$0x1]
        %v1333 = vsel %vm297, %v1329, 0.0
        %1334 = vadd.xlane.f32.xlu0 %v1333
        %v1335 = vpop.xlane.xlu0 %1334
        %v1336 = vsel %vm297, %v1330, 0.0
        %1337 = vadd.xlane.f32.xlu0 %v1336
        %v1338 = vpop.xlane.xlu0 %1337
        %v1339 = vmul.f32 %v1335, %v304
        %v1340 = vmul.f32 %v1338, %v304
        %v1341 = vsub.f32 %v1329, %v1339
        %v1342 = vsub.f32 %v1330, %v1340
        %v1343 = vmul.f32 %v1341, %v1341
        %v1344 = vmul.f32 %v1342, %v1342
        %v1345 = vsel %vm297, %v1343, 0.0
        %1346 = vadd.xlane.f32.xlu0 %v1345
        %v1347 = vpop.xlane.xlu0 %1346
        %v1348 = vsel %vm297, %v1344, 0.0
        %1349 = vadd.xlane.f32.xlu0 %v1348
        %v1350 = vpop.xlane.xlu0 %1349
        %v1351 = vmul.f32 %v1347, %v304
        %v1352 = vmul.f32 %v1350, %v304
        %v1353 = vadd.f32 %v1351, 1e-05
        %v1354 = vadd.f32 %v1352, 1e-05
        %v1355 = vrsqrt.pop %v1353
        %v1356 = vrsqrt.pop %v1354
        %v1357 = vmul.f32 %v1341, %v1355
        %v1358 = vmul.f32 %v1342, %v1356
        %v1359 = vlaneseq
        %v1360 = vshrl.u32 %v1359, 7
        %v1361 = vsub.s32 0, %v1360
        %v1362 = vrot.slane %v1331, %v1361
        %v1363 = vmul.f32 %v1357, %v1362
        %v1364 = vmul.f32 %v1358, %v1362
        %v1365 = vlaneseq
        %v1366 = vshrl.u32 %v1365, 7
        %v1367 = vsub.s32 0, %v1366
        %v1368 = vrot.slane %v1332, %v1367
        %v1369 = vadd.f32 %v1363, %v1368
        %v1370 = vadd.f32 %v1364, %v1368
        %v1371 = vmax.f32 %v1369, 0.0
        %v1372 = vmax.f32 %v1370, 0.0
        %v1373 = vld [vmem:[%s5 + $0x8] sm:$0xff]
        %v1375 = vsel %vm297, %v1373, 0
        %v1378 = vsel %vm297, %v1371, 0
        %v1381 = vsel %vm297, %v1372, 0
        %1383 = vmatprep.subr.mxu0 0.0
        %1384 = vmatpush1.xpose.msra.mxu0 0.0
        %1385 = vmatprep.subr.mxu0 0.0
        %1386 = vmatpush1.xpose.msra.mxu0 0.0
        %1387 = vmatprep.subr.mxu0 0.0
        %1388 = vmatpush1.xpose.msra.mxu0 0.0
        %1389 = vmatprep.subr.mxu0 0.0
        %1390 = vmatpush1.xpose.msra.mxu0 0.0
        %1391 = vmatprep.subr.mxu0 0.0
        %1392 = vmatpush1.xpose.msra.mxu0 0.0
        %1393 = vmatprep.subr.mxu0 0.0
        %1394 = vmatpush1.xpose.msra.mxu0 0.0
        %1395 = vmatprep.subr.mxu0 0.0
        %1396 = vmatpush1.xpose.msra.mxu0 0.0
        %1397 = vmatprep.subr.mxu0 0.0
        %1398 = vmatpush1.xpose.msra.mxu0 0.0
        %1399 = vmatprep.subr.mxu0 0.0
        %1400 = vmatpush1.xpose.msra.mxu0 0.0
        %1401 = vmatprep.subr.mxu0 0.0
        %1402 = vmatpush1.xpose.msra.mxu0 0.0
        %1403 = vmatprep.subr.mxu0 0.0
        %1404 = vmatpush1.xpose.msra.mxu0 0.0
        %1405 = vmatprep.subr.mxu0 0.0
        %1406 = vmatpush1.xpose.msra.mxu0 0.0
        %1407 = vmatprep.subr.mxu0 0.0
        %1408 = vmatpush1.xpose.msra.mxu0 0.0
        %1409 = vmatprep.subr.mxu0 0.0
        %1410 = vmatpush1.xpose.msra.mxu0 0.0
        %1411 = vmatprep.subr.mxu0 0.0
        %v1412 = vand.u32 %v1381, 4294901760
        %1413 = vmatpush1.xpose.msra.mxu0 %v1412
        %1414 = vmatprep.subr.mxu0 0.0
        %v1415 = vand.u32 %v1378, 4294901760
        %1416 = vmatpush1.xpose.msra.mxu0 %v1415
        %1417 = vmatprep.subr.mxu0 0.0
        %1418 = vmatpush2.xpose.msra.mxu0 0.0
        %1419 = vmatprep.subr.mxu0 0.0
        %1420 = vmatpush2.xpose.msra.mxu0 0.0
        %1421 = vmatprep.subr.mxu0 0.0
        %1422 = vmatpush2.xpose.msra.mxu0 0.0
        %1423 = vmatprep.subr.mxu0 0.0
        %1424 = vmatpush2.xpose.msra.mxu0 0.0
        %1425 = vmatprep.subr.mxu0 0.0
        %1426 = vmatpush2.xpose.msra.mxu0 0.0
        %1427 = vmatprep.subr.mxu0 0.0
        %1428 = vmatpush2.xpose.msra.mxu0 0.0
        %1429 = vmatprep.subr.mxu0 0.0
        %1430 = vmatpush2.xpose.msra.mxu0 0.0
        %1431 = vmatprep.subr.mxu0 0.0
        %1432 = vmatpush2.xpose.msra.mxu0 0.0
        %1433 = vmatprep.subr.mxu0 0.0
        %1434 = vmatpush2.xpose.msra.mxu0 0.0
        %1435 = vmatprep.subr.mxu0 0.0
        %1436 = vmatpush2.xpose.msra.mxu0 0.0
        %1437 = vmatprep.subr.mxu0 0.0
        %1438 = vmatpush2.xpose.msra.mxu0 0.0
        %1439 = vmatprep.subr.mxu0 0.0
        %1440 = vmatpush2.xpose.msra.mxu0 0.0
        %1441 = vmatprep.subr.mxu0 0.0
        %1442 = vmatpush2.xpose.msra.mxu0 0.0
        %1443 = vmatprep.subr.mxu0 0.0
        %1444 = vmatpush2.xpose.msra.mxu0 0.0
        %1445 = vmatprep.subr.mxu0 0.0
        %1446 = vmatpush2.xpose.msra.mxu0 0.0
        %1447 = vmatprep.subr.mxu0 0.0
        %1448 = vmatpush2.xpose.msra.mxu0 0.0
        %1449 = vmatprep.mubr.f32.mxu0 0.0
        %v1450 = vand.u32 %v1375, 4294901760
        %v1451 = vsub.f32 %v1375, %v1450
        %v1452 = vand.u32 %v1451, 4294901760
        %v1453 = vsub.f32 %v1451, %v1452
        %v1454 = vand.u32 %v1453, 4294901760
        %1455 = vmatmul.mubr.f32.gmra.mxu0 %v1454
        %v1456 = vpop.f32.mrf.mxu0
        %v1457 = vadd.f32 0.0, %v1456
        %v1458 = vpop.f32.mrf.mxu0
        %1459 = vdwg.mxu0
        %1460 = vmatprep.subr.mxu0 0.0
        %1461 = vmatpush1.xpose.msra.mxu0 0.0
        %1462 = vmatprep.subr.mxu0 0.0
        %1463 = vmatpush1.xpose.msra.mxu0 0.0
        %1464 = vmatprep.subr.mxu0 0.0
        %1465 = vmatpush1.xpose.msra.mxu0 0.0
        %1466 = vmatprep.subr.mxu0 0.0
        %1467 = vmatpush1.xpose.msra.mxu0 0.0
        %1468 = vmatprep.subr.mxu0 0.0
        %1469 = vmatpush1.xpose.msra.mxu0 0.0
        %1470 = vmatprep.subr.mxu0 0.0
        %1471 = vmatpush1.xpose.msra.mxu0 0.0
        %1472 = vmatprep.subr.mxu0 0.0
        %1473 = vmatpush1.xpose.msra.mxu0 0.0
        %1474 = vmatprep.subr.mxu0 0.0
        %1475 = vmatpush1.xpose.msra.mxu0 0.0
        %1476 = vmatprep.subr.mxu0 0.0
        %1477 = vmatpush1.xpose.msra.mxu0 0.0
        %1478 = vmatprep.subr.mxu0 0.0
        %1479 = vmatpush1.xpose.msra.mxu0 0.0
        %1480 = vmatprep.subr.mxu0 0.0
        %1481 = vmatpush1.xpose.msra.mxu0 0.0
        %1482 = vmatprep.subr.mxu0 0.0
        %1483 = vmatpush1.xpose.msra.mxu0 0.0
        %1484 = vmatprep.subr.mxu0 0.0
        %1485 = vmatpush1.xpose.msra.mxu0 0.0
        %1486 = vmatprep.subr.mxu0 0.0
        %1487 = vmatpush1.xpose.msra.mxu0 0.0
        %1488 = vmatprep.subr.mxu0 0.0
        %v1489 = vand.u32 %v1381, 4294901760
        %v1490 = vsub.f32 %v1381, %v1489
        %v1491 = vand.u32 %v1490, 4294901760
        %v1492 = vsub.f32 %v1490, %v1491
        %v1493 = vand.u32 %v1492, 4294901760
        %1494 = vmatpush1.xpose.msra.mxu0 %v1493
        %1495 = vmatprep.subr.mxu0 0.0
        %v1496 = vand.u32 %v1378, 4294901760
        %v1497 = vsub.f32 %v1378, %v1496
        %v1498 = vand.u32 %v1497, 4294901760
        %v1499 = vsub.f32 %v1497, %v1498
        %v1500 = vand.u32 %v1499, 4294901760
        %1501 = vmatpush1.xpose.msra.mxu0 %v1500
        %1502 = vmatprep.subr.mxu0 0.0
        %1503 = vmatpush2.xpose.msra.mxu0 0.0
        %1504 = vmatprep.subr.mxu0 0.0
        %1505 = vmatpush2.xpose.msra.mxu0 0.0
        %1506 = vmatprep.subr.mxu0 0.0
        %1507 = vmatpush2.xpose.msra.mxu0 0.0
        %1508 = vmatprep.subr.mxu0 0.0
        %1509 = vmatpush2.xpose.msra.mxu0 0.0
        %1510 = vmatprep.subr.mxu0 0.0
        %1511 = vmatpush2.xpose.msra.mxu0 0.0
        %1512 = vmatprep.subr.mxu0 0.0
        %1513 = vmatpush2.xpose.msra.mxu0 0.0
        %1514 = vmatprep.subr.mxu0 0.0
        %1515 = vmatpush2.xpose.msra.mxu0 0.0
        %1516 = vmatprep.subr.mxu0 0.0
        %1517 = vmatpush2.xpose.msra.mxu0 0.0
        %1518 = vmatprep.subr.mxu0 0.0
        %1519 = vmatpush2.xpose.msra.mxu0 0.0
        %1520 = vmatprep.subr.mxu0 0.0
        %1521 = vmatpush2.xpose.msra.mxu0 0.0
        %1522 = vmatprep.subr.mxu0 0.0
        %1523 = vmatpush2.xpose.msra.mxu0 0.0
        %1524 = vmatprep.subr.mxu0 0.0
        %1525 = vmatpush2.xpose.msra.mxu0 0.0
        %1526 = vmatprep.subr.mxu0 0.0
        %1527 = vmatpush2.xpose.msra.mxu0 0.0
        %1528 = vmatprep.subr.mxu0 0.0
        %1529 = vmatpush2.xpose.msra.mxu0 0.0
        %1530 = vmatprep.subr.mxu0 0.0
        %1531 = vmatpush2.xpose.msra.mxu0 0.0
        %1532 = vmatprep.subr.mxu0 0.0
        %1533 = vmatpush2.xpose.msra.mxu0 0.0
        %1534 = vmatprep.mubr.f32.mxu0 0.0
        %v1535 = vand.u32 %v1375, 4294901760
        %1536 = vmatmul.mubr.f32.gmra.mxu0 %v1535
        %v1537 = vpop.f32.mrf.mxu0
        %v1538 = vadd.f32 %v1457, %v1537
        %v1539 = vpop.f32.mrf.mxu0
        %1540 = vdwg.mxu0
        %1541 = vmatprep.subr.mxu0 0.0
        %1542 = vmatpush1.xpose.msra.mxu0 0.0
        %1543 = vmatprep.subr.mxu0 0.0
        %1544 = vmatpush1.xpose.msra.mxu0 0.0
        %1545 = vmatprep.subr.mxu0 0.0
        %1546 = vmatpush1.xpose.msra.mxu0 0.0
        %1547 = vmatprep.subr.mxu0 0.0
        %1548 = vmatpush1.xpose.msra.mxu0 0.0
        %1549 = vmatprep.subr.mxu0 0.0
        %1550 = vmatpush1.xpose.msra.mxu0 0.0
        %1551 = vmatprep.subr.mxu0 0.0
        %1552 = vmatpush1.xpose.msra.mxu0 0.0
        %1553 = vmatprep.subr.mxu0 0.0
        %1554 = vmatpush1.xpose.msra.mxu0 0.0
        %1555 = vmatprep.subr.mxu0 0.0
        %1556 = vmatpush1.xpose.msra.mxu0 0.0
        %1557 = vmatprep.subr.mxu0 0.0
        %1558 = vmatpush1.xpose.msra.mxu0 0.0
        %1559 = vmatprep.subr.mxu0 0.0
        %1560 = vmatpush1.xpose.msra.mxu0 0.0
        %1561 = vmatprep.subr.mxu0 0.0
        %1562 = vmatpush1.xpose.msra.mxu0 0.0
        %1563 = vmatprep.subr.mxu0 0.0
        %1564 = vmatpush1.xpose.msra.mxu0 0.0
        %1565 = vmatprep.subr.mxu0 0.0
        %1566 = vmatpush1.xpose.msra.mxu0 0.0
        %1567 = vmatprep.subr.mxu0 0.0
        %1568 = vmatpush1.xpose.msra.mxu0 0.0
        %1569 = vmatprep.subr.mxu0 0.0
        %v1570 = vand.u32 %v1381, 4294901760
        %v1571 = vsub.f32 %v1381, %v1570
        %1572 = vmatpush1.xpose.msra.mxu0 %v1571
        %1573 = vmatprep.subr.mxu0 0.0
        %v1574 = vand.u32 %v1378, 4294901760
        %v1575 = vsub.f32 %v1378, %v1574
        %1576 = vmatpush1.xpose.msra.mxu0 %v1575
        %1577 = vmatprep.subr.mxu0 0.0
        %1578 = vmatpush2.xpose.msra.mxu0 0.0
        %1579 = vmatprep.subr.mxu0 0.0
        %1580 = vmatpush2.xpose.msra.mxu0 0.0
        %1581 = vmatprep.subr.mxu0 0.0
        %1582 = vmatpush2.xpose.msra.mxu0 0.0
        %1583 = vmatprep.subr.mxu0 0.0
        %1584 = vmatpush2.xpose.msra.mxu0 0.0
        %1585 = vmatprep.subr.mxu0 0.0
        %1586 = vmatpush2.xpose.msra.mxu0 0.0
        %1587 = vmatprep.subr.mxu0 0.0
        %1588 = vmatpush2.xpose.msra.mxu0 0.0
        %1589 = vmatprep.subr.mxu0 0.0
        %1590 = vmatpush2.xpose.msra.mxu0 0.0
        %1591 = vmatprep.subr.mxu0 0.0
        %1592 = vmatpush2.xpose.msra.mxu0 0.0
        %1593 = vmatprep.subr.mxu0 0.0
        %1594 = vmatpush2.xpose.msra.mxu0 0.0
        %1595 = vmatprep.subr.mxu0 0.0
        %1596 = vmatpush2.xpose.msra.mxu0 0.0
        %1597 = vmatprep.subr.mxu0 0.0
        %1598 = vmatpush2.xpose.msra.mxu0 0.0
        %1599 = vmatprep.subr.mxu0 0.0
        %1600 = vmatpush2.xpose.msra.mxu0 0.0
        %1601 = vmatprep.subr.mxu0 0.0
        %1602 = vmatpush2.xpose.msra.mxu0 0.0
        %1603 = vmatprep.subr.mxu0 0.0
        %1604 = vmatpush2.xpose.msra.mxu0 0.0
        %1605 = vmatprep.subr.mxu0 0.0
        %1606 = vmatpush2.xpose.msra.mxu0 0.0
        %1607 = vmatprep.subr.mxu0 0.0
        %1608 = vmatpush2.xpose.msra.mxu0 0.0
        %1609 = vmatprep.mubr.f32.mxu0 0.0
        %v1610 = vand.u32 %v1375, 4294901760
        %v1611 = vsub.f32 %v1375, %v1610
        %1612 = vmatmul.mubr.f32.gmra.mxu0 %v1611
        %v1613 = vpop.f32.mrf.mxu0
        %v1614 = vadd.f32 %v1538, %v1613
        %v1615 = vpop.f32.mrf.mxu0
        %1616 = vdwg.mxu0
        %1617 = vmatprep.subr.mxu0 0.0
        %1618 = vmatpush1.xpose.msra.mxu0 0.0
        %1619 = vmatprep.subr.mxu0 0.0
        %1620 = vmatpush1.xpose.msra.mxu0 0.0
        %1621 = vmatprep.subr.mxu0 0.0
        %1622 = vmatpush1.xpose.msra.mxu0 0.0
        %1623 = vmatprep.subr.mxu0 0.0
        %1624 = vmatpush1.xpose.msra.mxu0 0.0
        %1625 = vmatprep.subr.mxu0 0.0
        %1626 = vmatpush1.xpose.msra.mxu0 0.0
        %1627 = vmatprep.subr.mxu0 0.0
        %1628 = vmatpush1.xpose.msra.mxu0 0.0
        %1629 = vmatprep.subr.mxu0 0.0
        %1630 = vmatpush1.xpose.msra.mxu0 0.0
        %1631 = vmatprep.subr.mxu0 0.0
        %1632 = vmatpush1.xpose.msra.mxu0 0.0
        %1633 = vmatprep.subr.mxu0 0.0
        %1634 = vmatpush1.xpose.msra.mxu0 0.0
        %1635 = vmatprep.subr.mxu0 0.0
        %1636 = vmatpush1.xpose.msra.mxu0 0.0
        %1637 = vmatprep.subr.mxu0 0.0
        %1638 = vmatpush1.xpose.msra.mxu0 0.0
        %1639 = vmatprep.subr.mxu0 0.0
        %1640 = vmatpush1.xpose.msra.mxu0 0.0
        %1641 = vmatprep.subr.mxu0 0.0
        %1642 = vmatpush1.xpose.msra.mxu0 0.0
        %1643 = vmatprep.subr.mxu0 0.0
        %1644 = vmatpush1.xpose.msra.mxu0 0.0
        %1645 = vmatprep.subr.mxu0 0.0
        %v1646 = vand.u32 %v1381, 4294901760
        %1647 = vmatpush1.xpose.msra.mxu0 %v1646
        %1648 = vmatprep.subr.mxu0 0.0
        %v1649 = vand.u32 %v1378, 4294901760
        %1650 = vmatpush1.xpose.msra.mxu0 %v1649
        %1651 = vmatprep.subr.mxu0 0.0
        %1652 = vmatpush2.xpose.msra.mxu0 0.0
        %1653 = vmatprep.subr.mxu0 0.0
        %1654 = vmatpush2.xpose.msra.mxu0 0.0
        %1655 = vmatprep.subr.mxu0 0.0
        %1656 = vmatpush2.xpose.msra.mxu0 0.0
        %1657 = vmatprep.subr.mxu0 0.0
        %1658 = vmatpush2.xpose.msra.mxu0 0.0
        %1659 = vmatprep.subr.mxu0 0.0
        %1660 = vmatpush2.xpose.msra.mxu0 0.0
        %1661 = vmatprep.subr.mxu0 0.0
        %1662 = vmatpush2.xpose.msra.mxu0 0.0
        %1663 = vmatprep.subr.mxu0 0.0
        %1664 = vmatpush2.xpose.msra.mxu0 0.0
        %1665 = vmatprep.subr.mxu0 0.0
        %1666 = vmatpush2.xpose.msra.mxu0 0.0
        %1667 = vmatprep.subr.mxu0 0.0
        %1668 = vmatpush2.xpose.msra.mxu0 0.0
        %1669 = vmatprep.subr.mxu0 0.0
        %1670 = vmatpush2.xpose.msra.mxu0 0.0
        %1671 = vmatprep.subr.mxu0 0.0
        %1672 = vmatpush2.xpose.msra.mxu0 0.0
        %1673 = vmatprep.subr.mxu0 0.0
        %1674 = vmatpush2.xpose.msra.mxu0 0.0
        %1675 = vmatprep.subr.mxu0 0.0
        %1676 = vmatpush2.xpose.msra.mxu0 0.0
        %1677 = vmatprep.subr.mxu0 0.0
        %1678 = vmatpush2.xpose.msra.mxu0 0.0
        %1679 = vmatprep.subr.mxu0 0.0
        %1680 = vmatpush2.xpose.msra.mxu0 0.0
        %1681 = vmatprep.subr.mxu0 0.0
        %1682 = vmatpush2.xpose.msra.mxu0 0.0
        %1683 = vmatprep.mubr.f32.mxu0 0.0
        %v1684 = vand.u32 %v1375, 4294901760
        %v1685 = vsub.f32 %v1375, %v1684
        %v1686 = vand.u32 %v1685, 4294901760
        %1687 = vmatmul.mubr.f32.gmra.mxu0 %v1686
        %v1688 = vpop.f32.mrf.mxu0
        %v1689 = vadd.f32 %v1614, %v1688
        %v1690 = vpop.f32.mrf.mxu0
        %1691 = vdwg.mxu0
        %1692 = vmatprep.subr.mxu0 0.0
        %1693 = vmatpush1.xpose.msra.mxu0 0.0
        %1694 = vmatprep.subr.mxu0 0.0
        %1695 = vmatpush1.xpose.msra.mxu0 0.0
        %1696 = vmatprep.subr.mxu0 0.0
        %1697 = vmatpush1.xpose.msra.mxu0 0.0
        %1698 = vmatprep.subr.mxu0 0.0
        %1699 = vmatpush1.xpose.msra.mxu0 0.0
        %1700 = vmatprep.subr.mxu0 0.0
        %1701 = vmatpush1.xpose.msra.mxu0 0.0
        %1702 = vmatprep.subr.mxu0 0.0
        %1703 = vmatpush1.xpose.msra.mxu0 0.0
        %1704 = vmatprep.subr.mxu0 0.0
        %1705 = vmatpush1.xpose.msra.mxu0 0.0
        %1706 = vmatprep.subr.mxu0 0.0
        %1707 = vmatpush1.xpose.msra.mxu0 0.0
        %1708 = vmatprep.subr.mxu0 0.0
        %1709 = vmatpush1.xpose.msra.mxu0 0.0
        %1710 = vmatprep.subr.mxu0 0.0
        %1711 = vmatpush1.xpose.msra.mxu0 0.0
        %1712 = vmatprep.subr.mxu0 0.0
        %1713 = vmatpush1.xpose.msra.mxu0 0.0
        %1714 = vmatprep.subr.mxu0 0.0
        %1715 = vmatpush1.xpose.msra.mxu0 0.0
        %1716 = vmatprep.subr.mxu0 0.0
        %1717 = vmatpush1.xpose.msra.mxu0 0.0
        %1718 = vmatprep.subr.mxu0 0.0
        %1719 = vmatpush1.xpose.msra.mxu0 0.0
        %1720 = vmatprep.subr.mxu0 0.0
        %v1721 = vand.u32 %v1381, 4294901760
        %v1722 = vsub.f32 %v1381, %v1721
        %v1723 = vand.u32 %v1722, 4294901760
        %1724 = vmatpush1.xpose.msra.mxu0 %v1723
        %1725 = vmatprep.subr.mxu0 0.0
        %v1726 = vand.u32 %v1378, 4294901760
        %v1727 = vsub.f32 %v1378, %v1726
        %v1728 = vand.u32 %v1727, 4294901760
        %1729 = vmatpush1.xpose.msra.mxu0 %v1728
        %1730 = vmatprep.subr.mxu0 0.0
        %1731 = vmatpush2.xpose.msra.mxu0 0.0
        %1732 = vmatprep.subr.mxu0 0.0
        %1733 = vmatpush2.xpose.msra.mxu0 0.0
        %1734 = vmatprep.subr.mxu0 0.0
        %1735 = vmatpush2.xpose.msra.mxu0 0.0
        %1736 = vmatprep.subr.mxu0 0.0
        %1737 = vmatpush2.xpose.msra.mxu0 0.0
        %1738 = vmatprep.subr.mxu0 0.0
        %1739 = vmatpush2.xpose.msra.mxu0 0.0
        %1740 = vmatprep.subr.mxu0 0.0
        %1741 = vmatpush2.xpose.msra.mxu0 0.0
        %1742 = vmatprep.subr.mxu0 0.0
        %1743 = vmatpush2.xpose.msra.mxu0 0.0
        %1744 = vmatprep.subr.mxu0 0.0
        %1745 = vmatpush2.xpose.msra.mxu0 0.0
        %1746 = vmatprep.subr.mxu0 0.0
        %1747 = vmatpush2.xpose.msra.mxu0 0.0
        %1748 = vmatprep.subr.mxu0 0.0
        %1749 = vmatpush2.xpose.msra.mxu0 0.0
        %1750 = vmatprep.subr.mxu0 0.0
        %1751 = vmatpush2.xpose.msra.mxu0 0.0
        %1752 = vmatprep.subr.mxu0 0.0
        %1753 = vmatpush2.xpose.msra.mxu0 0.0
        %1754 = vmatprep.subr.mxu0 0.0
        %1755 = vmatpush2.xpose.msra.mxu0 0.0
        %1756 = vmatprep.subr.mxu0 0.0
        %1757 = vmatpush2.xpose.msra.mxu0 0.0
        %1758 = vmatprep.subr.mxu0 0.0
        %1759 = vmatpush2.xpose.msra.mxu0 0.0
        %1760 = vmatprep.subr.mxu0 0.0
        %1761 = vmatpush2.xpose.msra.mxu0 0.0
        %1762 = vmatprep.mubr.f32.mxu0 0.0
        %v1763 = vand.u32 %v1375, 4294901760
        %1764 = vmatmul.mubr.f32.gmra.mxu0 %v1763
        %v1765 = vpop.f32.mrf.mxu0
        %v1766 = vadd.f32 %v1689, %v1765
        %v1767 = vpop.f32.mrf.mxu0
        %1768 = vdwg.mxu0
        %1769 = vmatprep.subr.mxu0 0.0
        %1770 = vmatpush1.xpose.msra.mxu0 0.0
        %1771 = vmatprep.subr.mxu0 0.0
        %1772 = vmatpush1.xpose.msra.mxu0 0.0
        %1773 = vmatprep.subr.mxu0 0.0
        %1774 = vmatpush1.xpose.msra.mxu0 0.0
        %1775 = vmatprep.subr.mxu0 0.0
        %1776 = vmatpush1.xpose.msra.mxu0 0.0
        %1777 = vmatprep.subr.mxu0 0.0
        %1778 = vmatpush1.xpose.msra.mxu0 0.0
        %1779 = vmatprep.subr.mxu0 0.0
        %1780 = vmatpush1.xpose.msra.mxu0 0.0
        %1781 = vmatprep.subr.mxu0 0.0
        %1782 = vmatpush1.xpose.msra.mxu0 0.0
        %1783 = vmatprep.subr.mxu0 0.0
        %1784 = vmatpush1.xpose.msra.mxu0 0.0
        %1785 = vmatprep.subr.mxu0 0.0
        %1786 = vmatpush1.xpose.msra.mxu0 0.0
        %1787 = vmatprep.subr.mxu0 0.0
        %1788 = vmatpush1.xpose.msra.mxu0 0.0
        %1789 = vmatprep.subr.mxu0 0.0
        %1790 = vmatpush1.xpose.msra.mxu0 0.0
        %1791 = vmatprep.subr.mxu0 0.0
        %1792 = vmatpush1.xpose.msra.mxu0 0.0
        %1793 = vmatprep.subr.mxu0 0.0
        %1794 = vmatpush1.xpose.msra.mxu0 0.0
        %1795 = vmatprep.subr.mxu0 0.0
        %1796 = vmatpush1.xpose.msra.mxu0 0.0
        %1797 = vmatprep.subr.mxu0 0.0
        %v1798 = vand.u32 %v1381, 4294901760
        %1799 = vmatpush1.xpose.msra.mxu0 %v1798
        %1800 = vmatprep.subr.mxu0 0.0
        %v1801 = vand.u32 %v1378, 4294901760
        %1802 = vmatpush1.xpose.msra.mxu0 %v1801
        %1803 = vmatprep.subr.mxu0 0.0
        %1804 = vmatpush2.xpose.msra.mxu0 0.0
        %1805 = vmatprep.subr.mxu0 0.0
        %1806 = vmatpush2.xpose.msra.mxu0 0.0
        %1807 = vmatprep.subr.mxu0 0.0
        %1808 = vmatpush2.xpose.msra.mxu0 0.0
        %1809 = vmatprep.subr.mxu0 0.0
        %1810 = vmatpush2.xpose.msra.mxu0 0.0
        %1811 = vmatprep.subr.mxu0 0.0
        %1812 = vmatpush2.xpose.msra.mxu0 0.0
        %1813 = vmatprep.subr.mxu0 0.0
        %1814 = vmatpush2.xpose.msra.mxu0 0.0
        %1815 = vmatprep.subr.mxu0 0.0
        %1816 = vmatpush2.xpose.msra.mxu0 0.0
        %1817 = vmatprep.subr.mxu0 0.0
        %1818 = vmatpush2.xpose.msra.mxu0 0.0
        %1819 = vmatprep.subr.mxu0 0.0
        %1820 = vmatpush2.xpose.msra.mxu0 0.0
        %1821 = vmatprep.subr.mxu0 0.0
        %1822 = vmatpush2.xpose.msra.mxu0 0.0
        %1823 = vmatprep.subr.mxu0 0.0
        %1824 = vmatpush2.xpose.msra.mxu0 0.0
        %1825 = vmatprep.subr.mxu0 0.0
        %1826 = vmatpush2.xpose.msra.mxu0 0.0
        %1827 = vmatprep.subr.mxu0 0.0
        %1828 = vmatpush2.xpose.msra.mxu0 0.0
        %1829 = vmatprep.subr.mxu0 0.0
        %1830 = vmatpush2.xpose.msra.mxu0 0.0
        %1831 = vmatprep.subr.mxu0 0.0
        %1832 = vmatpush2.xpose.msra.mxu0 0.0
        %1833 = vmatprep.subr.mxu0 0.0
        %1834 = vmatpush2.xpose.msra.mxu0 0.0
        %1835 = vmatprep.mubr.f32.mxu0 0.0
        %v1836 = vand.u32 %v1375, 4294901760
        %1837 = vmatmul.mubr.f32.gmra.mxu0 %v1836
        %v1838 = vpop.f32.mrf.mxu0
        %v1839 = vadd.f32 %v1766, %v1838
        %v1840 = vpop.f32.mrf.mxu0
        %1841 = vdwg.mxu0
        %v1842 = vadd.f32 %v1839, %v1087
        %1843 = vst.msk [vmem:[%s261 + $0x1] sm:$0x1] %vm1090, %v1842
        %s1844 = sand.u32 %s164, 1
        %s1845 = scalar_lea.sflag [#allocation3], %s1844
        %s1846 = sand.u32 %s164, 1
        %s1847 = smul.addr %s1846, 2
        %s1848 = scalar_lea.vmem [#allocation2], %s1847
        // Predicated region
        $region45: #{tpu_custom_call.1} parent=43 // pred_check
          %p1849 = pneg %p174
        $region46: #{tpu_custom_call.1} parent=43 // pred_check_branch
          %1851 = sbr.rel (%p1849) target = $region48
        $region47: #{tpu_custom_call.1} parent=43 // pred_region
          %s1853 = ssub.s32 32, 32
          %1854 = vsyncadd %s1845, %s1853
          %s1855 = smul.addr %s20, 32
          %s1856 = scalar_lea.hbm %s6, %s1855
          %s1858 = sshll.u32 %s1848, 4
          %s1859 = int_to_ptr.vmem [resolvable:$true] %s1858
          %1861 = dma.vmem_to_hbm [thread:$0]  %s1859, 32, %s1856, %s1845
        $region48: #{tpu_custom_call.1} parent=43 // pred_fallthru
          _
      $region44: #{tpu_custom_call.1} parent=5 // pred_fallthru
        _
      %p1862 = scmp.le.s32.totalorder 2, %s15
      // Predicated region
      $region49: #{tpu_custom_call.1} parent=5 // pred_check
        %p1863 = pneg %p1862
      $region50: #{tpu_custom_call.1} parent=5 // pred_check_branch
        %1865 = sbr.rel (%p1863) target = $region52
      $region51: #{tpu_custom_call.1} parent=5 // pred_region
        %s1866 = ssub.s32 %s15, 2
        // Predicated region
        $region53: #{tpu_custom_call.1} parent=51 // pred_check
          %p1867 = pneg %p180
        $region54: #{tpu_custom_call.1} parent=51 // pred_check_branch
          %1869 = sbr.rel (%p1867) target = $region56
        $region55: #{tpu_custom_call.1} parent=51 // pred_region
          %s1870 = sand.u32 %s165, 1
          %s1871 = scalar_lea.sflag [#allocation3], %s1870
          %s1872 = sand.u32 %s165, 1
          %s1873 = smul.addr %s1872, 2
          %s1874 = scalar_lea.vmem [#allocation2], %s1873
          %1875 = dma.done %s1871, 32
        $region56: #{tpu_custom_call.1} parent=51 // pred_fallthru
          _
      $region52: #{tpu_custom_call.1} parent=5 // pred_fallthru
        _
    $region6: #{tpu_custom_call.1} parent=1 // loop_footer
      %s19 = sadd.s32 1, %s15
    $region7: #{tpu_custom_call.1} parent=1 // loop_footer_branch
      %14 = sbr.rel target = $region3
    $region8: #{tpu_custom_call.1} parent=1 // loop_exit
      _
    %1876 = vsyncpa [#allocation3], 1
    %s1877 = scalar_lea.sflag [#allocation3], 1
    %1878 = vsyncpa %s1877, 1

</llo_original>
